<compile_context>
chip_gen: v7x
topology: tpu7x:2x2x1
jax: 0.10.0
libtpu: 0.0.40
codegen_flags: <defaults>
</compile_context>

<pallas_src>
import math
import numpy as np
import jax
import jax.numpy as jnp
from jax.experimental import pallas as pl
from jax.experimental.pallas import tpu as pltpu

# ---- small, module-consistent config -------------------------------------
B = 2            # batch
S = 8            # seq len == max_seq_len
E = 32           # embed_size
DFF = 64         # d_ff
NVOCAB = 50      # n_vocab (padding_idx = NVOCAB - 1)
NVOCAB_PAD = 64  # vocab rows padded with zeros -> clean MXU contraction dim
NLAYERS = 2
LN_EPS = 1e-5    # nn.LayerNorm default
LANE = 128       # packed-slab lane width (lane-dense weight slabs)
W_ROWS = 3 * E + DFF   # wqkv rows 0:E | wo E:2E | w1 2E:3E | w2 3E:3E+DFF
BS = B * S


# ---------------------------------------------------------------------------
# Single fused Pallas kernel: embed + PE + 2x transformer block + head.
# ---------------------------------------------------------------------------
def fused_transformer_kernel(onehot_ref, emb_ref, pe_ref, amask_ref,
                             wmat_ref, vvec_ref, hw_ref, hb_ref,
                             out_ref, attn_ref):
    # ---- Embedder (one-hot matmul gather, one-hot built in wrapper) --------
    emb = jnp.dot(onehot_ref[...], emb_ref[...],
                  preferred_element_type=jnp.float32)            # (B*S, E)
    # ---- PositionalEncoder (pe pre-tiled to (B*S, E) in wrapper) -----------
    x = math.sqrt(E) * emb + pe_ref[...]                         # (B*S, E)

    amask = amask_ref[...]                                       # (B*S, B*S) additive

    def layernorm(h, g, b):
        mean = jnp.mean(h, axis=-1, keepdims=True)
        var = jnp.mean((h - mean) ** 2, axis=-1, keepdims=True)
        return (h - mean) * jax.lax.rsqrt(var + LN_EPS) * g + b

    inv_sqrt_e = 1.0 / math.sqrt(E)

    # ---- 2x TransformerBlock (unrolled; params sliced out of packed slabs) -
    for l in range(NLAYERS):
        wqkv = wmat_ref[l, 0:E, :]                               # (E, 128) full-lane (cols 96:128 are zero)
        wo = wmat_ref[l, E:2 * E, 0:E]                           # (E, E)
        w1 = wmat_ref[l, 2 * E:3 * E, 0:DFF]                     # (E, DFF)
        w2 = wmat_ref[l, 3 * E:3 * E + DFF, 0:E]                 # (DFF, E)

        ln1_g = vvec_ref[l, 0:1, 0:E]
        ln1_b = vvec_ref[l, 1:2, 0:E]
        bqkv = vvec_ref[l, 2:3, :]                               # (1, 128), zeros beyond 3E
        bo = vvec_ref[l, 3:4, 0:E]
        ln2_g = vvec_ref[l, 4:5, 0:E]
        ln2_b = vvec_ref[l, 5:6, 0:E]
        b1 = vvec_ref[l, 6:7, 0:DFF]
        b2 = vvec_ref[l, 7:8, 0:E]

        # --- attention sub-block (fused QKV projection, block-diag batch) ---
        xn = layernorm(x, ln1_g, ln1_b)
        qkv = jnp.dot(xn, wqkv, preferred_element_type=jnp.float32) + bqkv  # (B*S, 128)
        q = qkv[:, 0:E]
        k = qkv[:, E:2 * E]
        v = qkv[:, 2 * E:3 * E]

        # scores over the whole batch at once; additive mask kills cross-batch
        # and padded-key entries (exp underflows to exactly 0).
        scores = jax.lax.dot_general(
            q, k, (((1,), (1,)), ((), ())),
            preferred_element_type=jnp.float32) * inv_sqrt_e     # (B*S, B*S)
        scores = scores + amask
        scores = scores - jnp.max(scores, axis=-1, keepdims=True)
        es = jnp.exp(scores)
        attn = es * pl.reciprocal(jnp.sum(es, axis=-1, keepdims=True))
        attn_ref[l] = attn                                       # one store per layer

        ctx = jnp.dot(attn, v, preferred_element_type=jnp.float32)  # (B*S, E)
        attn_out = jnp.dot(ctx, wo, preferred_element_type=jnp.float32) + bo
        x2 = x + attn_out                                        # dropout -> identity

        # --- feed-forward sub-block -----------------------------------------
        xn2 = layernorm(x2, ln2_g, ln2_b)
        h = jnp.maximum(jnp.dot(xn2, w1, preferred_element_type=jnp.float32) + b1, 0.0)
        ff = jnp.dot(h, w2, preferred_element_type=jnp.float32) + b2
        x = x2 + ff

    # ---- ClassificationHead: run on the full activation (same MXU pass); ----
    # the wrapper extracts rows {0, S} (position-0 token of each batch element).
    out_ref[...] = (jnp.dot(x, hw_ref[...], preferred_element_type=jnp.float32)
                    + hb_ref[...])


def transformer_forward(tokens, mask, emb_pad, pe, wmat, vvec, head_w, head_b):
    """Full forward pass in one pallas_call.

    tokens: (B, S) int32; mask: (B, S) float32 (1=keep, 0=pad);
    emb_pad: (NVOCAB_PAD, E); pe: (S, E);
    wmat: (NLAYERS, W_ROWS, LANE); vvec: (NLAYERS, 8, LANE);
    head_w: (E, E) [in, out]; head_b: (E,)
    Returns (x4 (B,E), norm_weights1 (B,S,S), norm_weights2 (B,S,S)).
    """
    # ---- cheap prep done in plain XLA (outside the latency-bound kernel) ---
    tok_flat = tokens.reshape(BS)
    onehot = (tok_flat[:, None] ==
              jnp.arange(NVOCAB_PAD, dtype=jnp.int32)[None, :]).astype(jnp.float32)
    pe_tiled = jnp.tile(pe, (B, 1))                              # (B*S, E)
    batch_ids = jnp.repeat(jnp.arange(B), S)                     # (B*S,)
    same_batch = batch_ids[:, None] == batch_ids[None, :]
    key_keep = mask.reshape(BS) > 0.5
    amask = jnp.where(same_batch & key_keep[None, :], 0.0, -1e9).astype(jnp.float32)

    vmem_spec = pl.BlockSpec(memory_space=pltpu.MemorySpace.VMEM)
    head_full, attn_full = pl.pallas_call(
        fused_transformer_kernel,
        out_shape=(
            jax.ShapeDtypeStruct((BS, E), jnp.float32),
            jax.ShapeDtypeStruct((NLAYERS, BS, BS), jnp.float32),
        ),
        in_specs=[vmem_spec] * 8,
        out_specs=(vmem_spec, vmem_spec),
        compiler_params=pltpu.CompilerParams(vmem_limit_bytes=32 * 1024 * 1024),
    )(onehot, emb_pad, pe_tiled, amask, wmat, vvec, head_w, head_b.reshape(1, E))
    # TODO(synk): if B*S ever grows, add a batch grid axis with
    # dimension_semantics=("parallel",) to use both v7x TensorCores.

    x4 = head_full[0::S, :]                                      # rows {0, S} -> (B, E)
    nw1 = jnp.stack([attn_full[0, b * S:(b + 1) * S, b * S:(b + 1) * S]
                     for b in range(B)], axis=0)
    nw2 = jnp.stack([attn_full[1, b * S:(b + 1) * S, b * S:(b + 1) * S]
                     for b in range(B)], axis=0)
    return x4, nw1, nw2


# ---------------------------------------------------------------------------
# Deterministic parameter construction (shapes from the PyTorch __init__).
# Linear weights are stored pre-transposed as [in, out].
# ---------------------------------------------------------------------------
def make_block_params(key):
    ks = jax.random.split(key, 9)
    std = 0.02
    ln1_g = jnp.ones((E,), jnp.float32)
    ln1_b = jnp.zeros((E,), jnp.float32)
    wq = std * jax.random.normal(ks[0], (E, E), jnp.float32)
    bq = std * jax.random.normal(ks[1], (E,), jnp.float32)
    wk = std * jax.random.normal(ks[2], (E, E), jnp.float32)
    bk = std * jax.random.normal(ks[3], (E,), jnp.float32)
    wv = std * jax.random.normal(ks[4], (E, E), jnp.float32)
    bv = std * jax.random.normal(ks[5], (E,), jnp.float32)
    wo = std * jax.random.normal(ks[6], (E, E), jnp.float32)
    bo = std * jax.random.normal(ks[7], (E,), jnp.float32)
    ln2_g = jnp.ones((E,), jnp.float32)
    ln2_b = jnp.zeros((E,), jnp.float32)
    w1 = std * jax.random.normal(ks[8], (E, DFF), jnp.float32)
    b1 = jnp.zeros((DFF,), jnp.float32)
    w2 = std * jax.random.normal(jax.random.fold_in(key, 99), (DFF, E), jnp.float32)
    b2 = jnp.zeros((E,), jnp.float32)
    return (ln1_g, ln1_b, wq, bq, wk, bk, wv, bv, wo, bo,
            ln2_g, ln2_b, w1, b1, w2, b2)


def pack_block_params(p):
    """Pack one block's 16 parameter arrays into one matrix slab + one vector slab."""
    (ln1_g, ln1_b, wq, bq, wk, bk, wv, bv, wo, bo,
     ln2_g, ln2_b, w1, b1, w2, b2) = p
    wmat = jnp.zeros((W_ROWS, LANE), jnp.float32)
    wmat = wmat.at[0:E, 0:3 * E].set(jnp.concatenate([wq, wk, wv], axis=1))
    wmat = wmat.at[E:2 * E, 0:E].set(wo)
    wmat = wmat.at[2 * E:3 * E, 0:DFF].set(w1)
    wmat = wmat.at[3 * E:3 * E + DFF, 0:E].set(w2)
    vvec = jnp.zeros((8, LANE), jnp.float32)
    vvec = vvec.at[0, 0:E].set(ln1_g)
    vvec = vvec.at[1, 0:E].set(ln1_b)
    vvec = vvec.at[2, 0:3 * E].set(jnp.concatenate([bq, bk, bv]))
    vvec = vvec.at[3, 0:E].set(bo)
    vvec = vvec.at[4, 0:E].set(ln2_g)
    vvec = vvec.at[5, 0:E].set(ln2_b)
    vvec = vvec.at[6, 0:DFF].set(b1)
    vvec = vvec.at[7, 0:E].set(b2)
    return wmat, vvec


def make_positional_encoding():
    # Mirrors the PyTorch source exactly (sin uses 2*i/E, cos uses 2*(i+1)/E).
    pe = np.zeros((S, E), dtype=np.float32)
    for pos in range(S):
        for i in range(0, E, 2):
            pe[pos, i] = math.sin(pos / 10000 ** (2 * i / E))
            pe[pos, i + 1] = math.cos(pos / 10000 ** (2 * (i + 1) / E))
    return jnp.asarray(pe)


# Pure-JAX reference (same math) for a sanity check.
def _ref_block(x, mask3, p):
    (g1, be1, wq, bq, wk, bk, wv, bv, wo, bo, g2, be2, w1, bb1, w2, bb2) = p

    def ln(h, g, b):
        m = jnp.mean(h, -1, keepdims=True)
        v = jnp.mean((h - m) ** 2, -1, keepdims=True)
        return (h - m) * jax.lax.rsqrt(v + LN_EPS) * g + b

    xn = ln(x, g1, be1)
    q = xn @ wq + bq
    k = xn @ wk + bk
    v = xn @ wv + bv
    sc = jnp.einsum("bqd,bkd->bqk", q, k) / math.sqrt(E)
    sc = jnp.where(mask3 == 0.0, -1e9, sc)
    at = jax.nn.softmax(sc, axis=-1)
    x2 = x + (jnp.einsum("bqk,bkd->bqd", at, v) @ wo + bo)
    xn2 = ln(x2, g2, be2)
    ff = jnp.maximum(xn2 @ w1 + bb1, 0.0) @ w2 + bb2
    return x2 + ff, at


if __name__ == "__main__":
    key = jax.random.PRNGKey(0)
    k_tok, k_emb, k_b1, k_b2, k_head = jax.random.split(key, 5)

    # ---- inputs ----
    tokens = jax.random.randint(k_tok, (B, S), 0, NVOCAB, dtype=jnp.int32)
    mask = jnp.ones((B, S), jnp.float32).at[:, -2:].set(0.0)   # last 2 positions padded

    # ---- parameters ----
    emb_table = 0.02 * jax.random.normal(k_emb, (NVOCAB, E), jnp.float32)
    emb_table = emb_table.at[NVOCAB - 1].set(0.0)              # padding_idx row
    emb_pad = jnp.zeros((NVOCAB_PAD, E), jnp.float32).at[:NVOCAB].set(emb_table)
    pe = make_positional_encoding()

    params1 = make_block_params(k_b1)
    params2 = make_block_params(k_b2)
    wmat1, vvec1 = pack_block_params(params1)
    wmat2, vvec2 = pack_block_params(params2)
    wmat = jnp.stack([wmat1, wmat2])                           # (2, 160, 128)
    vvec = jnp.stack([vvec1, vvec2])                           # (2, 8, 128)

    head_w = 0.02 * jax.random.normal(k_head, (E, E), jnp.float32)  # [in, out]
    head_b = jnp.zeros((E,), jnp.float32)

    # ---- fused forward (single pallas_call) ----
    fwd = jax.jit(transformer_forward)
    x4, norm_weights1, norm_weights2 = fwd(
        tokens, mask, emb_pad, pe, wmat, vvec, head_w, head_b)
    jax.block_until_ready((x4, norm_weights1, norm_weights2))

    # ---- sanity check vs. plain-JAX reference ----
    mask3 = mask.reshape(B, 1, S)
    x_in = math.sqrt(E) * emb_table[tokens] + pe[None, :, :]
    r1, a1 = _ref_block(x_in, mask3, params1)
    r2, a2 = _ref_block(r1, mask3, params2)
    r4 = r2[:, 0, :] @ head_w + head_b
    assert np.allclose(np.asarray(x4), np.asarray(r4), atol=2e-4, rtol=2e-4)
    assert np.allclose(np.asarray(norm_weights1), np.asarray(a1), atol=2e-4, rtol=2e-4)
    assert np.allclose(np.asarray(norm_weights2), np.asarray(a2), atol=2e-4, rtol=2e-4)

    print("KERNEL_OK")
</pallas_src>

<mosaic_0001>
module attributes {stable_mosaic.version = 11 : i64} {
  func.func @fused_transformer_kernel(%arg0: memref<16x64xf32, #tpu.memory_space<vmem>>, %arg1: memref<64x32xf32, #tpu.memory_space<vmem>>, %arg2: memref<16x32xf32, #tpu.memory_space<vmem>>, %arg3: memref<16x16xf32, #tpu.memory_space<vmem>>, %arg4: memref<2x160x128xf32, #tpu.memory_space<vmem>>, %arg5: memref<2x8x128xf32, #tpu.memory_space<vmem>>, %arg6: memref<32x32xf32, #tpu.memory_space<vmem>>, %arg7: memref<1x32xf32, #tpu.memory_space<vmem>>, %arg8: memref<16x32xf32, #tpu.memory_space<vmem>>, %arg9: memref<2x16x16xf32, #tpu.memory_space<vmem>>) attributes {dimension_semantics = [], scalar_prefetch = 0 : i64, scratch_operands = 0 : i64, tpu.core_type = #tpu.core_type<tc>} {
    %c0 = arith.constant 0 : index
    %c0_0 = arith.constant 0 : index
    %0 = vector.load %arg0[%c0, %c0_0] : memref<16x64xf32, #tpu.memory_space<vmem>>, vector<16x64xf32>
    %c0_1 = arith.constant 0 : index
    %c0_2 = arith.constant 0 : index
    %1 = vector.load %arg1[%c0_1, %c0_2] : memref<64x32xf32, #tpu.memory_space<vmem>>, vector<64x32xf32>
    %cst = arith.constant dense<0.000000e+00> : vector<16x32xf32>
    %2 = tpu.matmul %0, %1, %cst {dimension_numbers = #tpu.dot_dimension_numbers<[1], [0], [0], [1], [0, 0, 1, 1], [], []>} : vector<16x64xf32>, vector<64x32xf32>, vector<16x32xf32> -> vector<16x32xf32>
    %cst_3 = arith.constant 5.65685415 : f32
    %3 = vector.broadcast %cst_3 : f32 to vector<16x32xf32>
    %4 = arith.mulf %3, %2 : vector<16x32xf32>
    %c0_4 = arith.constant 0 : index
    %c0_5 = arith.constant 0 : index
    %5 = vector.load %arg2[%c0_4, %c0_5] : memref<16x32xf32, #tpu.memory_space<vmem>>, vector<16x32xf32>
    %6 = arith.addf %4, %5 : vector<16x32xf32>
    %c0_6 = arith.constant 0 : index
    %c0_7 = arith.constant 0 : index
    %7 = vector.load %arg3[%c0_6, %c0_7] : memref<16x16xf32, #tpu.memory_space<vmem>>, vector<16x16xf32>
    %c0_8 = arith.constant 0 : index
    %c0_9 = arith.constant 0 : index
    %c0_10 = arith.constant 0 : index
    %8 = vector.load %arg4[%c0_8, %c0_9, %c0_10] : memref<2x160x128xf32, #tpu.memory_space<vmem>>, vector<1x32x128xf32>
    %9 = vector.shape_cast %8 : vector<1x32x128xf32> to vector<32x128xf32>
    %c0_11 = arith.constant 0 : index
    %c32 = arith.constant 32 : index
    %c0_12 = arith.constant 0 : index
    %10 = vector.load %arg4[%c0_11, %c32, %c0_12] : memref<2x160x128xf32, #tpu.memory_space<vmem>>, vector<1x32x32xf32>
    %11 = vector.shape_cast %10 : vector<1x32x32xf32> to vector<32x32xf32>
    %c0_13 = arith.constant 0 : index
    %c64 = arith.constant 64 : index
    %c0_14 = arith.constant 0 : index
    %12 = vector.load %arg4[%c0_13, %c64, %c0_14] : memref<2x160x128xf32, #tpu.memory_space<vmem>>, vector<1x32x64xf32>
    %13 = vector.shape_cast %12 : vector<1x32x64xf32> to vector<32x64xf32>
    %c0_15 = arith.constant 0 : index
    %c96 = arith.constant 96 : index
    %c0_16 = arith.constant 0 : index
    %14 = vector.load %arg4[%c0_15, %c96, %c0_16] : memref<2x160x128xf32, #tpu.memory_space<vmem>>, vector<1x64x32xf32>
    %15 = vector.shape_cast %14 : vector<1x64x32xf32> to vector<64x32xf32>
    %c0_17 = arith.constant 0 : index
    %c0_18 = arith.constant 0 : index
    %c0_19 = arith.constant 0 : index
    %16 = vector.load %arg5[%c0_17, %c0_18, %c0_19] : memref<2x8x128xf32, #tpu.memory_space<vmem>>, vector<1x1x32xf32>
    %17 = vector.shape_cast %16 : vector<1x1x32xf32> to vector<1x32xf32>
    %c0_20 = arith.constant 0 : index
    %c1 = arith.constant 1 : index
    %c0_21 = arith.constant 0 : index
    %18 = vector.load %arg5[%c0_20, %c1, %c0_21] : memref<2x8x128xf32, #tpu.memory_space<vmem>>, vector<1x1x32xf32>
    %19 = vector.shape_cast %18 : vector<1x1x32xf32> to vector<1x32xf32>
    %c0_22 = arith.constant 0 : index
    %c2 = arith.constant 2 : index
    %c0_23 = arith.constant 0 : index
    %20 = vector.load %arg5[%c0_22, %c2, %c0_23] : memref<2x8x128xf32, #tpu.memory_space<vmem>>, vector<1x1x128xf32>
    %21 = vector.shape_cast %20 : vector<1x1x128xf32> to vector<1x128xf32>
    %c0_24 = arith.constant 0 : index
    %c3 = arith.constant 3 : index
    %c0_25 = arith.constant 0 : index
    %22 = vector.load %arg5[%c0_24, %c3, %c0_25] : memref<2x8x128xf32, #tpu.memory_space<vmem>>, vector<1x1x32xf32>
    %23 = vector.shape_cast %22 : vector<1x1x32xf32> to vector<1x32xf32>
    %c0_26 = arith.constant 0 : index
    %c4 = arith.constant 4 : index
    %c0_27 = arith.constant 0 : index
    %24 = vector.load %arg5[%c0_26, %c4, %c0_27] : memref<2x8x128xf32, #tpu.memory_space<vmem>>, vector<1x1x32xf32>
    %25 = vector.shape_cast %24 : vector<1x1x32xf32> to vector<1x32xf32>
    %c0_28 = arith.constant 0 : index
    %c5 = arith.constant 5 : index
    %c0_29 = arith.constant 0 : index
    %26 = vector.load %arg5[%c0_28, %c5, %c0_29] : memref<2x8x128xf32, #tpu.memory_space<vmem>>, vector<1x1x32xf32>
    %27 = vector.shape_cast %26 : vector<1x1x32xf32> to vector<1x32xf32>
    %c0_30 = arith.constant 0 : index
    %c6 = arith.constant 6 : index
    %c0_31 = arith.constant 0 : index
    %28 = vector.load %arg5[%c0_30, %c6, %c0_31] : memref<2x8x128xf32, #tpu.memory_space<vmem>>, vector<1x1x64xf32>
    %29 = vector.shape_cast %28 : vector<1x1x64xf32> to vector<1x64xf32>
    %c0_32 = arith.constant 0 : index
    %c7 = arith.constant 7 : index
    %c0_33 = arith.constant 0 : index
    %30 = vector.load %arg5[%c0_32, %c7, %c0_33] : memref<2x8x128xf32, #tpu.memory_space<vmem>>, vector<1x1x32xf32>
    %31 = vector.shape_cast %30 : vector<1x1x32xf32> to vector<1x32xf32>
    %cst_34 = arith.constant dense<0.000000e+00> : vector<16xf32>
    %32 = vector.multi_reduction <add>, %6, %cst_34 [1] : vector<16x32xf32> to vector<16xf32>
    %33 = vector.shape_cast %32 : vector<16xf32> to vector<16x1xf32>
    %cst_35 = arith.constant 3.200000e+01 : f32
    %34 = vector.broadcast %cst_35 : f32 to vector<16x1xf32>
    %35 = arith.divf %33, %34 : vector<16x1xf32>
    %36 = vector.broadcast %35 : vector<16x1xf32> to vector<16x32xf32>
    %37 = arith.subf %6, %36 : vector<16x32xf32>
    %38 = arith.mulf %37, %37 : vector<16x32xf32>
    %cst_36 = arith.constant dense<0.000000e+00> : vector<16xf32>
    %39 = vector.multi_reduction <add>, %38, %cst_36 [1] : vector<16x32xf32> to vector<16xf32>
    %40 = vector.shape_cast %39 : vector<16xf32> to vector<16x1xf32>
    %cst_37 = arith.constant 3.200000e+01 : f32
    %41 = vector.broadcast %cst_37 : f32 to vector<16x1xf32>
    %42 = arith.divf %40, %41 : vector<16x1xf32>
    %43 = vector.broadcast %35 : vector<16x1xf32> to vector<16x32xf32>
    %44 = arith.subf %6, %43 : vector<16x32xf32>
    %cst_38 = arith.constant 9.99999974E-6 : f32
    %45 = vector.broadcast %cst_38 : f32 to vector<16x1xf32>
    %46 = arith.addf %42, %45 : vector<16x1xf32>
    %47 = math.rsqrt %46 : vector<16x1xf32>
    %48 = vector.broadcast %47 : vector<16x1xf32> to vector<16x32xf32>
    %49 = arith.mulf %44, %48 : vector<16x32xf32>
    %50 = vector.broadcast %17 : vector<1x32xf32> to vector<16x32xf32>
    %51 = arith.mulf %49, %50 : vector<16x32xf32>
    %52 = vector.broadcast %19 : vector<1x32xf32> to vector<16x32xf32>
    %53 = arith.addf %51, %52 : vector<16x32xf32>
    %cst_39 = arith.constant dense<0.000000e+00> : vector<16x128xf32>
    %54 = tpu.matmul %53, %9, %cst_39 {dimension_numbers = #tpu.dot_dimension_numbers<[1], [0], [0], [1], [0, 0, 1, 1], [], []>} : vector<16x32xf32>, vector<32x128xf32>, vector<16x128xf32> -> vector<16x128xf32>
    %55 = vector.broadcast %21 : vector<1x128xf32> to vector<16x128xf32>
    %56 = arith.addf %54, %55 : vector<16x128xf32>
    %57 = vector.extract_strided_slice %56 {offsets = [0, 0], sizes = [16, 32], strides = [1, 1]} : vector<16x128xf32> to vector<16x32xf32>
    %58 = vector.extract_strided_slice %56 {offsets = [0, 32], sizes = [16, 32], strides = [1, 1]} : vector<16x128xf32> to vector<16x32xf32>
    %59 = vector.extract_strided_slice %56 {offsets = [0, 64], sizes = [16, 32], strides = [1, 1]} : vector<16x128xf32> to vector<16x32xf32>
    %cst_40 = arith.constant dense<0.000000e+00> : vector<16x16xf32>
    %60 = tpu.matmul %57, %58, %cst_40 {dimension_numbers = #tpu.dot_dimension_numbers<[1], [1], [0], [0], [0, 0, 1, 0], [], []>} : vector<16x32xf32>, vector<16x32xf32>, vector<16x16xf32> -> vector<16x16xf32>
    %cst_41 = arith.constant 0.176776692 : f32
    %61 = vector.broadcast %cst_41 : f32 to vector<16x16xf32>
    %62 = arith.mulf %60, %61 : vector<16x16xf32>
    %63 = arith.addf %62, %7 : vector<16x16xf32>
    %cst_42 = arith.constant dense<0xFF800000> : vector<16xf32>
    %64 = vector.multi_reduction <maximumf>, %63, %cst_42 [1] : vector<16x16xf32> to vector<16xf32>
    %65 = vector.shape_cast %64 : vector<16xf32> to vector<16x1xf32>
    %66 = vector.broadcast %65 : vector<16x1xf32> to vector<16x16xf32>
    %67 = arith.subf %63, %66 : vector<16x16xf32>
    %68 = math.exp %67 : vector<16x16xf32>
    %cst_43 = arith.constant dense<0.000000e+00> : vector<16xf32>
    %69 = vector.multi_reduction <add>, %68, %cst_43 [1] : vector<16x16xf32> to vector<16xf32>
    %70 = vector.shape_cast %69 : vector<16xf32> to vector<16x1xf32>
    %71 = tpu.reciprocal %70 : vector<16x1xf32> -> vector<16x1xf32>
    %72 = vector.broadcast %71 : vector<16x1xf32> to vector<16x16xf32>
    %73 = arith.mulf %68, %72 : vector<16x16xf32>
    %c0_44 = arith.constant 0 : index
    %c0_45 = arith.constant 0 : index
    %c0_46 = arith.constant 0 : index
    %74 = vector.load %arg9[%c0_44, %c0_45, %c0_46] : memref<2x16x16xf32, #tpu.memory_space<vmem>>, vector<1x16x16xf32>
    %75 = vector.shape_cast %74 : vector<1x16x16xf32> to vector<16x16xf32>
    %76 = vector.shape_cast %73 : vector<16x16xf32> to vector<1x16x16xf32>
    tpu.vector_store %arg9[%c0_44, %c0_45, %c0_46], %76 {strides = array<i32>} : memref<2x16x16xf32, #tpu.memory_space<vmem>>, vector<1x16x16xf32>,
    %cst_47 = arith.constant dense<0.000000e+00> : vector<16x32xf32>
    %77 = tpu.matmul %73, %59, %cst_47 {dimension_numbers = #tpu.dot_dimension_numbers<[1], [0], [0], [1], [0, 0, 1, 1], [], []>} : vector<16x16xf32>, vector<16x32xf32>, vector<16x32xf32> -> vector<16x32xf32>
    %cst_48 = arith.constant dense<0.000000e+00> : vector<16x32xf32>
    %78 = tpu.matmul %77, %11, %cst_48 {dimension_numbers = #tpu.dot_dimension_numbers<[1], [0], [0], [1], [0, 0, 1, 1], [], []>} : vector<16x32xf32>, vector<32x32xf32>, vector<16x32xf32> -> vector<16x32xf32>
    %79 = vector.broadcast %23 : vector<1x32xf32> to vector<16x32xf32>
    %80 = arith.addf %78, %79 : vector<16x32xf32>
    %81 = arith.addf %6, %80 : vector<16x32xf32>
    %cst_49 = arith.constant dense<0.000000e+00> : vector<16xf32>
    %82 = vector.multi_reduction <add>, %81, %cst_49 [1] : vector<16x32xf32> to vector<16xf32>
    %83 = vector.shape_cast %82 : vector<16xf32> to vector<16x1xf32>
    %cst_50 = arith.constant 3.200000e+01 : f32
    %84 = vector.broadcast %cst_50 : f32 to vector<16x1xf32>
    %85 = arith.divf %83, %84 : vector<16x1xf32>
    %86 = vector.broadcast %85 : vector<16x1xf32> to vector<16x32xf32>
    %87 = arith.subf %81, %86 : vector<16x32xf32>
    %88 = arith.mulf %87, %87 : vector<16x32xf32>
    %cst_51 = arith.constant dense<0.000000e+00> : vector<16xf32>
    %89 = vector.multi_reduction <add>, %88, %cst_51 [1] : vector<16x32xf32> to vector<16xf32>
    %90 = vector.shape_cast %89 : vector<16xf32> to vector<16x1xf32>
    %cst_52 = arith.constant 3.200000e+01 : f32
    %91 = vector.broadcast %cst_52 : f32 to vector<16x1xf32>
    %92 = arith.divf %90, %91 : vector<16x1xf32>
    %93 = vector.broadcast %85 : vector<16x1xf32> to vector<16x32xf32>
    %94 = arith.subf %81, %93 : vector<16x32xf32>
    %cst_53 = arith.constant 9.99999974E-6 : f32
    %95 = vector.broadcast %cst_53 : f32 to vector<16x1xf32>
    %96 = arith.addf %92, %95 : vector<16x1xf32>
    %97 = math.rsqrt %96 : vector<16x1xf32>
    %98 = vector.broadcast %97 : vector<16x1xf32> to vector<16x32xf32>
    %99 = arith.mulf %94, %98 : vector<16x32xf32>
    %100 = vector.broadcast %25 : vector<1x32xf32> to vector<16x32xf32>
    %101 = arith.mulf %99, %100 : vector<16x32xf32>
    %102 = vector.broadcast %27 : vector<1x32xf32> to vector<16x32xf32>
    %103 = arith.addf %101, %102 : vector<16x32xf32>
    %cst_54 = arith.constant dense<0.000000e+00> : vector<16x64xf32>
    %104 = tpu.matmul %103, %13, %cst_54 {dimension_numbers = #tpu.dot_dimension_numbers<[1], [0], [0], [1], [0, 0, 1, 1], [], []>} : vector<16x32xf32>, vector<32x64xf32>, vector<16x64xf32> -> vector<16x64xf32>
    %105 = vector.broadcast %29 : vector<1x64xf32> to vector<16x64xf32>
    %106 = arith.addf %104, %105 : vector<16x64xf32>
    %cst_55 = arith.constant 0.000000e+00 : f32
    %107 = vector.broadcast %cst_55 : f32 to vector<16x64xf32>
    %108 = arith.maximumf %106, %107 : vector<16x64xf32>
    %cst_56 = arith.constant dense<0.000000e+00> : vector<16x32xf32>
    %109 = tpu.matmul %108, %15, %cst_56 {dimension_numbers = #tpu.dot_dimension_numbers<[1], [0], [0], [1], [0, 0, 1, 1], [], []>} : vector<16x64xf32>, vector<64x32xf32>, vector<16x32xf32> -> vector<16x32xf32>
    %110 = vector.broadcast %31 : vector<1x32xf32> to vector<16x32xf32>
    %111 = arith.addf %109, %110 : vector<16x32xf32>
    %112 = arith.addf %81, %111 : vector<16x32xf32>
    %c1_57 = arith.constant 1 : index
    %c0_58 = arith.constant 0 : index
    %c0_59 = arith.constant 0 : index
    %113 = vector.load %arg4[%c1_57, %c0_58, %c0_59] : memref<2x160x128xf32, #tpu.memory_space<vmem>>, vector<1x32x128xf32>
    %114 = vector.shape_cast %113 : vector<1x32x128xf32> to vector<32x128xf32>
    %c1_60 = arith.constant 1 : index
    %c32_61 = arith.constant 32 : index
    %c0_62 = arith.constant 0 : index
    %115 = vector.load %arg4[%c1_60, %c32_61, %c0_62] : memref<2x160x128xf32, #tpu.memory_space<vmem>>, vector<1x32x32xf32>
    %116 = vector.shape_cast %115 : vector<1x32x32xf32> to vector<32x32xf32>
    %c1_63 = arith.constant 1 : index
    %c64_64 = arith.constant 64 : index
    %c0_65 = arith.constant 0 : index
    %117 = vector.load %arg4[%c1_63, %c64_64, %c0_65] : memref<2x160x128xf32, #tpu.memory_space<vmem>>, vector<1x32x64xf32>
    %118 = vector.shape_cast %117 : vector<1x32x64xf32> to vector<32x64xf32>
    %c1_66 = arith.constant 1 : index
    %c96_67 = arith.constant 96 : index
    %c0_68 = arith.constant 0 : index
    %119 = vector.load %arg4[%c1_66, %c96_67, %c0_68] : memref<2x160x128xf32, #tpu.memory_space<vmem>>, vector<1x64x32xf32>
    %120 = vector.shape_cast %119 : vector<1x64x32xf32> to vector<64x32xf32>
    %c1_69 = arith.constant 1 : index
    %c0_70 = arith.constant 0 : index
    %c0_71 = arith.constant 0 : index
    %121 = vector.load %arg5[%c1_69, %c0_70, %c0_71] : memref<2x8x128xf32, #tpu.memory_space<vmem>>, vector<1x1x32xf32>
    %122 = vector.shape_cast %121 : vector<1x1x32xf32> to vector<1x32xf32>
    %c1_72 = arith.constant 1 : index
    %c1_73 = arith.constant 1 : index
    %c0_74 = arith.constant 0 : index
    %123 = vector.load %arg5[%c1_72, %c1_73, %c0_74] : memref<2x8x128xf32, #tpu.memory_space<vmem>>, vector<1x1x32xf32>
    %124 = vector.shape_cast %123 : vector<1x1x32xf32> to vector<1x32xf32>
    %c1_75 = arith.constant 1 : index
    %c2_76 = arith.constant 2 : index
    %c0_77 = arith.constant 0 : index
    %125 = vector.load %arg5[%c1_75, %c2_76, %c0_77] : memref<2x8x128xf32, #tpu.memory_space<vmem>>, vector<1x1x128xf32>
    %126 = vector.shape_cast %125 : vector<1x1x128xf32> to vector<1x128xf32>
    %c1_78 = arith.constant 1 : index
    %c3_79 = arith.constant 3 : index
    %c0_80 = arith.constant 0 : index
    %127 = vector.load %arg5[%c1_78, %c3_79, %c0_80] : memref<2x8x128xf32, #tpu.memory_space<vmem>>, vector<1x1x32xf32>
    %128 = vector.shape_cast %127 : vector<1x1x32xf32> to vector<1x32xf32>
    %c1_81 = arith.constant 1 : index
    %c4_82 = arith.constant 4 : index
    %c0_83 = arith.constant 0 : index
    %129 = vector.load %arg5[%c1_81, %c4_82, %c0_83] : memref<2x8x128xf32, #tpu.memory_space<vmem>>, vector<1x1x32xf32>
    %130 = vector.shape_cast %129 : vector<1x1x32xf32> to vector<1x32xf32>
    %c1_84 = arith.constant 1 : index
    %c5_85 = arith.constant 5 : index
    %c0_86 = arith.constant 0 : index
    %131 = vector.load %arg5[%c1_84, %c5_85, %c0_86] : memref<2x8x128xf32, #tpu.memory_space<vmem>>, vector<1x1x32xf32>
    %132 = vector.shape_cast %131 : vector<1x1x32xf32> to vector<1x32xf32>
    %c1_87 = arith.constant 1 : index
    %c6_88 = arith.constant 6 : index
    %c0_89 = arith.constant 0 : index
    %133 = vector.load %arg5[%c1_87, %c6_88, %c0_89] : memref<2x8x128xf32, #tpu.memory_space<vmem>>, vector<1x1x64xf32>
    %134 = vector.shape_cast %133 : vector<1x1x64xf32> to vector<1x64xf32>
    %c1_90 = arith.constant 1 : index
    %c7_91 = arith.constant 7 : index
    %c0_92 = arith.constant 0 : index
    %135 = vector.load %arg5[%c1_90, %c7_91, %c0_92] : memref<2x8x128xf32, #tpu.memory_space<vmem>>, vector<1x1x32xf32>
    %136 = vector.shape_cast %135 : vector<1x1x32xf32> to vector<1x32xf32>
    %cst_93 = arith.constant dense<0.000000e+00> : vector<16xf32>
    %137 = vector.multi_reduction <add>, %112, %cst_93 [1] : vector<16x32xf32> to vector<16xf32>
    %138 = vector.shape_cast %137 : vector<16xf32> to vector<16x1xf32>
    %cst_94 = arith.constant 3.200000e+01 : f32
    %139 = vector.broadcast %cst_94 : f32 to vector<16x1xf32>
    %140 = arith.divf %138, %139 : vector<16x1xf32>
    %141 = vector.broadcast %140 : vector<16x1xf32> to vector<16x32xf32>
    %142 = arith.subf %112, %141 : vector<16x32xf32>
    %143 = arith.mulf %142, %142 : vector<16x32xf32>
    %cst_95 = arith.constant dense<0.000000e+00> : vector<16xf32>
    %144 = vector.multi_reduction <add>, %143, %cst_95 [1] : vector<16x32xf32> to vector<16xf32>
    %145 = vector.shape_cast %144 : vector<16xf32> to vector<16x1xf32>
    %cst_96 = arith.constant 3.200000e+01 : f32
    %146 = vector.broadcast %cst_96 : f32 to vector<16x1xf32>
    %147 = arith.divf %145, %146 : vector<16x1xf32>
    %148 = vector.broadcast %140 : vector<16x1xf32> to vector<16x32xf32>
    %149 = arith.subf %112, %148 : vector<16x32xf32>
    %cst_97 = arith.constant 9.99999974E-6 : f32
    %150 = vector.broadcast %cst_97 : f32 to vector<16x1xf32>
    %151 = arith.addf %147, %150 : vector<16x1xf32>
    %152 = math.rsqrt %151 : vector<16x1xf32>
    %153 = vector.broadcast %152 : vector<16x1xf32> to vector<16x32xf32>
    %154 = arith.mulf %149, %153 : vector<16x32xf32>
    %155 = vector.broadcast %122 : vector<1x32xf32> to vector<16x32xf32>
    %156 = arith.mulf %154, %155 : vector<16x32xf32>
    %157 = vector.broadcast %124 : vector<1x32xf32> to vector<16x32xf32>
    %158 = arith.addf %156, %157 : vector<16x32xf32>
    %cst_98 = arith.constant dense<0.000000e+00> : vector<16x128xf32>
    %159 = tpu.matmul %158, %114, %cst_98 {dimension_numbers = #tpu.dot_dimension_numbers<[1], [0], [0], [1], [0, 0, 1, 1], [], []>} : vector<16x32xf32>, vector<32x128xf32>, vector<16x128xf32> -> vector<16x128xf32>
    %160 = vector.broadcast %126 : vector<1x128xf32> to vector<16x128xf32>
    %161 = arith.addf %159, %160 : vector<16x128xf32>
    %162 = vector.extract_strided_slice %161 {offsets = [0, 0], sizes = [16, 32], strides = [1, 1]} : vector<16x128xf32> to vector<16x32xf32>
    %163 = vector.extract_strided_slice %161 {offsets = [0, 32], sizes = [16, 32], strides = [1, 1]} : vector<16x128xf32> to vector<16x32xf32>
    %164 = vector.extract_strided_slice %161 {offsets = [0, 64], sizes = [16, 32], strides = [1, 1]} : vector<16x128xf32> to vector<16x32xf32>
    %cst_99 = arith.constant dense<0.000000e+00> : vector<16x16xf32>
    %165 = tpu.matmul %162, %163, %cst_99 {dimension_numbers = #tpu.dot_dimension_numbers<[1], [1], [0], [0], [0, 0, 1, 0], [], []>} : vector<16x32xf32>, vector<16x32xf32>, vector<16x16xf32> -> vector<16x16xf32>
    %cst_100 = arith.constant 0.176776692 : f32
    %166 = vector.broadcast %cst_100 : f32 to vector<16x16xf32>
    %167 = arith.mulf %165, %166 : vector<16x16xf32>
    %168 = arith.addf %167, %7 : vector<16x16xf32>
    %cst_101 = arith.constant dense<0xFF800000> : vector<16xf32>
    %169 = vector.multi_reduction <maximumf>, %168, %cst_101 [1] : vector<16x16xf32> to vector<16xf32>
    %170 = vector.shape_cast %169 : vector<16xf32> to vector<16x1xf32>
    %171 = vector.broadcast %170 : vector<16x1xf32> to vector<16x16xf32>
    %172 = arith.subf %168, %171 : vector<16x16xf32>
    %173 = math.exp %172 : vector<16x16xf32>
    %cst_102 = arith.constant dense<0.000000e+00> : vector<16xf32>
    %174 = vector.multi_reduction <add>, %173, %cst_102 [1] : vector<16x16xf32> to vector<16xf32>
    %175 = vector.shape_cast %174 : vector<16xf32> to vector<16x1xf32>
    %176 = tpu.reciprocal %175 : vector<16x1xf32> -> vector<16x1xf32>
    %177 = vector.broadcast %176 : vector<16x1xf32> to vector<16x16xf32>
    %178 = arith.mulf %173, %177 : vector<16x16xf32>
    %c1_103 = arith.constant 1 : index
    %c0_104 = arith.constant 0 : index
    %c0_105 = arith.constant 0 : index
    %179 = vector.load %arg9[%c1_103, %c0_104, %c0_105] : memref<2x16x16xf32, #tpu.memory_space<vmem>>, vector<1x16x16xf32>
    %180 = vector.shape_cast %179 : vector<1x16x16xf32> to vector<16x16xf32>
    %181 = vector.shape_cast %178 : vector<16x16xf32> to vector<1x16x16xf32>
    tpu.vector_store %arg9[%c1_103, %c0_104, %c0_105], %181 {strides = array<i32>} : memref<2x16x16xf32, #tpu.memory_space<vmem>>, vector<1x16x16xf32>,
    %cst_106 = arith.constant dense<0.000000e+00> : vector<16x32xf32>
    %182 = tpu.matmul %178, %164, %cst_106 {dimension_numbers = #tpu.dot_dimension_numbers<[1], [0], [0], [1], [0, 0, 1, 1], [], []>} : vector<16x16xf32>, vector<16x32xf32>, vector<16x32xf32> -> vector<16x32xf32>
    %cst_107 = arith.constant dense<0.000000e+00> : vector<16x32xf32>
    %183 = tpu.matmul %182, %116, %cst_107 {dimension_numbers = #tpu.dot_dimension_numbers<[1], [0], [0], [1], [0, 0, 1, 1], [], []>} : vector<16x32xf32>, vector<32x32xf32>, vector<16x32xf32> -> vector<16x32xf32>
    %184 = vector.broadcast %128 : vector<1x32xf32> to vector<16x32xf32>
    %185 = arith.addf %183, %184 : vector<16x32xf32>
    %186 = arith.addf %112, %185 : vector<16x32xf32>
    %cst_108 = arith.constant dense<0.000000e+00> : vector<16xf32>
    %187 = vector.multi_reduction <add>, %186, %cst_108 [1] : vector<16x32xf32> to vector<16xf32>
    %188 = vector.shape_cast %187 : vector<16xf32> to vector<16x1xf32>
    %cst_109 = arith.constant 3.200000e+01 : f32
    %189 = vector.broadcast %cst_109 : f32 to vector<16x1xf32>
    %190 = arith.divf %188, %189 : vector<16x1xf32>
    %191 = vector.broadcast %190 : vector<16x1xf32> to vector<16x32xf32>
    %192 = arith.subf %186, %191 : vector<16x32xf32>
    %193 = arith.mulf %192, %192 : vector<16x32xf32>
    %cst_110 = arith.constant dense<0.000000e+00> : vector<16xf32>
    %194 = vector.multi_reduction <add>, %193, %cst_110 [1] : vector<16x32xf32> to vector<16xf32>
    %195 = vector.shape_cast %194 : vector<16xf32> to vector<16x1xf32>
    %cst_111 = arith.constant 3.200000e+01 : f32
    %196 = vector.broadcast %cst_111 : f32 to vector<16x1xf32>
    %197 = arith.divf %195, %196 : vector<16x1xf32>
    %198 = vector.broadcast %190 : vector<16x1xf32> to vector<16x32xf32>
    %199 = arith.subf %186, %198 : vector<16x32xf32>
    %cst_112 = arith.constant 9.99999974E-6 : f32
    %200 = vector.broadcast %cst_112 : f32 to vector<16x1xf32>
    %201 = arith.addf %197, %200 : vector<16x1xf32>
    %202 = math.rsqrt %201 : vector<16x1xf32>
    %203 = vector.broadcast %202 : vector<16x1xf32> to vector<16x32xf32>
    %204 = arith.mulf %199, %203 : vector<16x32xf32>
    %205 = vector.broadcast %130 : vector<1x32xf32> to vector<16x32xf32>
    %206 = arith.mulf %204, %205 : vector<16x32xf32>
    %207 = vector.broadcast %132 : vector<1x32xf32> to vector<16x32xf32>
    %208 = arith.addf %206, %207 : vector<16x32xf32>
    %cst_113 = arith.constant dense<0.000000e+00> : vector<16x64xf32>
    %209 = tpu.matmul %208, %118, %cst_113 {dimension_numbers = #tpu.dot_dimension_numbers<[1], [0], [0], [1], [0, 0, 1, 1], [], []>} : vector<16x32xf32>, vector<32x64xf32>, vector<16x64xf32> -> vector<16x64xf32>
    %210 = vector.broadcast %134 : vector<1x64xf32> to vector<16x64xf32>
    %211 = arith.addf %209, %210 : vector<16x64xf32>
    %cst_114 = arith.constant 0.000000e+00 : f32
    %212 = vector.broadcast %cst_114 : f32 to vector<16x64xf32>
    %213 = arith.maximumf %211, %212 : vector<16x64xf32>
    %cst_115 = arith.constant dense<0.000000e+00> : vector<16x32xf32>
    %214 = tpu.matmul %213, %120, %cst_115 {dimension_numbers = #tpu.dot_dimension_numbers<[1], [0], [0], [1], [0, 0, 1, 1], [], []>} : vector<16x64xf32>, vector<64x32xf32>, vector<16x32xf32> -> vector<16x32xf32>
    %215 = vector.broadcast %136 : vector<1x32xf32> to vector<16x32xf32>
    %216 = arith.addf %214, %215 : vector<16x32xf32>
    %217 = arith.addf %186, %216 : vector<16x32xf32>
    %c0_116 = arith.constant 0 : index
    %c0_117 = arith.constant 0 : index
    %218 = vector.load %arg6[%c0_116, %c0_117] : memref<32x32xf32, #tpu.memory_space<vmem>>, vector<32x32xf32>
    %cst_118 = arith.constant dense<0.000000e+00> : vector<16x32xf32>
    %219 = tpu.matmul %217, %218, %cst_118 {dimension_numbers = #tpu.dot_dimension_numbers<[1], [0], [0], [1], [0, 0, 1, 1], [], []>} : vector<16x32xf32>, vector<32x32xf32>, vector<16x32xf32> -> vector<16x32xf32>
    %c0_119 = arith.constant 0 : index
    %c0_120 = arith.constant 0 : index
    %220 = vector.load %arg7[%c0_119, %c0_120] : memref<1x32xf32, #tpu.memory_space<vmem>>, vector<1x32xf32>
    %221 = vector.broadcast %220 : vector<1x32xf32> to vector<16x32xf32>
    %222 = arith.addf %219, %221 : vector<16x32xf32>
    %c0_121 = arith.constant 0 : index
    %c0_122 = arith.constant 0 : index
    %223 = vector.load %arg8[%c0_121, %c0_122] : memref<16x32xf32, #tpu.memory_space<vmem>>, vector<16x32xf32>
    tpu.vector_store %arg8[%c0_121, %c0_122], %222 {strides = array<i32>} : memref<16x32xf32, #tpu.memory_space<vmem>>, vector<16x32xf32>,
    return
  }
}

</mosaic_0001>

<llo_original>
// kernel: eq.15
$region0: #{eq.15}
  %s0 = inlined_call_operand.vmem [shape: s32[2,8], index: 0, kind: input, shape index: {}]
  %s1 = inlined_call_operand.vmem [shape: s32[16], index: 1, kind: output, shape index: {}]
  $region1: #{eq.15} parent=0
    #allocation0 [shape = 'u8[4096]{0}', space=vmem, size = 0x1000, scoped, tag = 'scoped mem for output reshape']
    #allocation1 [shape = 'u8[4096]{0}', space=vmem, size = 0x1000, scoped, tag = 'scoped mem for input reshape']
    %s3 = sshllo.u32 0, 2
    %v4 = vld [vmem:[%s0] sm:%s3]
    %5 = vst [vmem:[#allocation1] sm:%s3] %v4
    %v6 = vld [vmem:[#allocation1] sm:$0x1]
    %vm7 = vcmask 64512
    %8 = vst.msk [vmem:[#allocation0] sm:$0x1] %vm7, %v6
    %s9 = scalar_lea.vmem [#allocation1], 1
    %v10 = vld [vmem:[%s9] sm:$0x1]
    %11 = vrot.lane.b32.xlu0 %v10, 8
    %v12 = vpop.permute.xlu0 %11
    %vm13 = vcmask 130112
    %14 = vst.msk [vmem:[#allocation0] sm:$0x1] %vm13, %v12
    %s16 = sshllo.u32 0, 1
    %v18 = vld [vmem:[#allocation0] sm:%s16]
    %s19 = sshllo.u32 0, 1
    %20 = vst [vmem:[%s1] sm:%s19] %v18

// kernel: transformer_forward.1
$region0: #{transformer_forward.1}
  #allocation0 [shape = 'u32[]', space=smem, size = 0x4, offset = 0x4, fixed_abs, tag = 'smem constant byte address 0x4 - core index']
  #allocation1 [shape = 'u32[144,128]{1,0:T(1,128)}', space=vmem, size = 0x12000, scoped, tag = 'internal scratch']
  %s0 = inlined_call_operand.vmem [shape: f32[16,64], index: 0, kind: input, shape index: {}]
  %s1 = inlined_call_operand.vmem [shape: f32[64,32], index: 1, kind: input, shape index: {}]
  %s2 = inlined_call_operand.vmem [shape: f32[16,32], index: 2, kind: input, shape index: {}]
  %s3 = inlined_call_operand.vmem [shape: f32[16,16], index: 3, kind: input, shape index: {}]
  %s4 = inlined_call_operand.hbm [shape: f32[2,160,128], index: 4, kind: input, shape index: {}]
  %s5 = inlined_call_operand.vmem [shape: f32[2,8,128], index: 5, kind: input, shape index: {}]
  %s6 = inlined_call_operand.vmem [shape: f32[32,32], index: 6, kind: input, shape index: {}]
  %s7 = inlined_call_operand.vmem [shape: f32[1,32], index: 7, kind: input, shape index: {}]
  %s8 = inlined_call_operand.vmem [shape: f32[16,32], index: 8, kind: output, shape index: {0}]
  %s9 = inlined_call_operand.vmem [shape: f32[2,16,16], index: 9, kind: output, shape index: {1}]
  %10 = xla_tuple %s8, %s9
  %s11 = sld [smem:[#allocation0]]
  $region54: #{transformer_forward.1} parent=0
    _
  %s13 = ssub.s32 1, %s11
  %s14 = scalar_select 0, %s13, %s11
  $region1: #{transformer_forward.1} parent=0
    #allocation2 [shape = 'u8[163840]{0}', space=vmem, size = 0x28000, scoped, tag = 'input window, operand 4, single buffered']
    #allocation3 [shape = 's32[1]{0}', space=sflag, size = 0x4, scoped, tag = 'scoped memory for transformer_forward.1']
    %15 = vsyncpa [#allocation3], 0
    // Predicated region
    $region2: #{transformer_forward.1} parent=1 // pred_check
      _
    $region3: #{transformer_forward.1} parent=1 // pred_check_branch
      %17 = sbr.rel (0) target = $region5
    $region4: #{transformer_forward.1} parent=1 // pred_region
      _
    $region5: #{transformer_forward.1} parent=1 // pred_fallthru
      _
    // Predicated region
    $region6: #{transformer_forward.1} parent=1 // pred_check
      _
    $region7: #{transformer_forward.1} parent=1 // pred_check_branch
      %19 = sbr.rel (0) target = $region9
    $region8: #{transformer_forward.1} parent=1 // pred_region
      _
    $region9: #{transformer_forward.1} parent=1 // pred_fallthru
      _
    // Predicated region
    $region10: #{transformer_forward.1} parent=1 // pred_check
      _
    $region11: #{transformer_forward.1} parent=1 // pred_check_branch
      %21 = sbr.rel (0) target = $region13
    $region12: #{transformer_forward.1} parent=1 // pred_region
      _
    $region13: #{transformer_forward.1} parent=1 // pred_fallthru
      _
    // Predicated region
    $region14: #{transformer_forward.1} parent=1 // pred_check
      _
    $region15: #{transformer_forward.1} parent=1 // pred_check_branch
      %23 = sbr.rel (0) target = $region17
    $region16: #{transformer_forward.1} parent=1 // pred_region
      _
    $region17: #{transformer_forward.1} parent=1 // pred_fallthru
      _
    // Predicated region
    $region18: #{transformer_forward.1} parent=1 // pred_check
      _
    $region19: #{transformer_forward.1} parent=1 // pred_check_branch
      %25 = sbr.rel (0) target = $region21
    $region20: #{transformer_forward.1} parent=1 // pred_region
      %s27 = ssub.s32 5120, 5120
      %28 = vsyncadd [#allocation3], %s27
      %s29 = sshll.u32 [#allocation2], 4
      %s30 = int_to_ptr.vmem [resolvable:$true] %s29
      %35 = dma.hbm_to_vmem [thread:$0]  %s4, 5120, %s30, [#allocation3], 128, 128, 8
    $region21: #{transformer_forward.1} parent=1 // pred_fallthru
      _
    // Predicated region
    $region22: #{transformer_forward.1} parent=1 // pred_check
      _
    $region23: #{transformer_forward.1} parent=1 // pred_check_branch
      %37 = sbr.rel (0) target = $region25
    $region24: #{transformer_forward.1} parent=1 // pred_region
      _
    $region25: #{transformer_forward.1} parent=1 // pred_fallthru
      _
    // Predicated region
    $region26: #{transformer_forward.1} parent=1 // pred_check
      _
    $region27: #{transformer_forward.1} parent=1 // pred_check_branch
      %39 = sbr.rel (0) target = $region29
    $region28: #{transformer_forward.1} parent=1 // pred_region
      _
    $region29: #{transformer_forward.1} parent=1 // pred_fallthru
      _
    // Predicated region
    $region30: #{transformer_forward.1} parent=1 // pred_check
      _
    $region31: #{transformer_forward.1} parent=1 // pred_check_branch
      %41 = sbr.rel (0) target = $region33
    $region32: #{transformer_forward.1} parent=1 // pred_region
      _
    $region33: #{transformer_forward.1} parent=1 // pred_fallthru
      _
    // Predicated region
    $region34: #{transformer_forward.1} parent=1 // pred_check
      _
    $region35: #{transformer_forward.1} parent=1 // pred_check_branch
      %43 = sbr.rel (0) target = $region37
    $region36: #{transformer_forward.1} parent=1 // pred_region
      %44 = dma.done [#allocation3], 5120
    $region37: #{transformer_forward.1} parent=1 // pred_fallthru
      _
    %v45 = vld [vmem:[%s0] sm:$0xff]
    %v46 = vld [vmem:[%s0 + $0x8] sm:$0xff]
    %v47 = vld [vmem:[%s1] sm:$0xff]
    %v48 = vld [vmem:[%s1 + $0x8] sm:$0xff]
    %v49 = vld [vmem:[%s1 + $0x10] sm:$0xff]
    %v50 = vld [vmem:[%s1 + $0x18] sm:$0xff]
    %v51 = vld [vmem:[%s1 + $0x20] sm:$0xff]
    %v52 = vld [vmem:[%s1 + $0x28] sm:$0xff]
    %v53 = vld [vmem:[%s1 + $0x30] sm:$0xff]
    %v54 = vld [vmem:[%s1 + $0x38] sm:$0xff]
    %vm55 = vcmask 523264
    %v57 = vsel %vm55, %v45, 0
    %v60 = vsel %vm55, %v46, 0
    %62 = vmatprep.subr.mxu0 0.0
    %63 = vmatpush1.msra.mxu0 %v47
    %64 = vmatprep.subr.mxu0 0.0
    %65 = vmatpush1.msra.mxu0 %v48
    %66 = vmatprep.subr.mxu0 0.0
    %67 = vmatpush1.msra.mxu0 %v49
    %68 = vmatprep.subr.mxu0 0.0
    %69 = vmatpush1.msra.mxu0 %v50
    %70 = vmatprep.subr.mxu0 0.0
    %71 = vmatpush1.msra.mxu0 %v51
    %72 = vmatprep.subr.mxu0 0.0
    %73 = vmatpush1.msra.mxu0 %v52
    %74 = vmatprep.subr.mxu0 0.0
    %75 = vmatpush1.msra.mxu0 %v53
    %76 = vmatprep.subr.mxu0 0.0
    %77 = vmatpush1.msra.mxu0 %v54
    %78 = vmatprep.subr.mxu0 0.0
    %79 = vmatpush1.msra.mxu0 0.0
    %80 = vmatprep.subr.mxu0 0.0
    %81 = vmatpush1.msra.mxu0 0.0
    %82 = vmatprep.subr.mxu0 0.0
    %83 = vmatpush1.msra.mxu0 0.0
    %84 = vmatprep.subr.mxu0 0.0
    %85 = vmatpush1.msra.mxu0 0.0
    %86 = vmatprep.subr.mxu0 0.0
    %87 = vmatpush1.msra.mxu0 0.0
    %88 = vmatprep.subr.mxu0 0.0
    %89 = vmatpush1.msra.mxu0 0.0
    %90 = vmatprep.subr.mxu0 0.0
    %91 = vmatpush1.msra.mxu0 0.0
    %92 = vmatprep.subr.mxu0 0.0
    %93 = vmatpush1.msra.mxu0 0.0
    %94 = vmatprep.subr.mxu0 0.0
    %95 = vmatpush1.msra.mxu0 0.0
    %96 = vmatprep.subr.mxu0 0.0
    %97 = vmatpush1.msra.mxu0 0.0
    %98 = vmatprep.subr.mxu0 0.0
    %99 = vmatpush1.msra.mxu0 0.0
    %100 = vmatprep.subr.mxu0 0.0
    %101 = vmatpush1.msra.mxu0 0.0
    %102 = vmatprep.subr.mxu0 0.0
    %103 = vmatpush1.msra.mxu0 0.0
    %104 = vmatprep.subr.mxu0 0.0
    %105 = vmatpush1.msra.mxu0 0.0
    %106 = vmatprep.subr.mxu0 0.0
    %107 = vmatpush1.msra.mxu0 0.0
    %108 = vmatprep.subr.mxu0 0.0
    %109 = vmatpush1.msra.mxu0 0.0
    %110 = vmatprep.subr.mxu0 0.0
    %111 = vmatpush1.msra.mxu0 0.0
    %112 = vmatprep.subr.mxu0 0.0
    %113 = vmatpush1.msra.mxu0 0.0
    %114 = vmatprep.subr.mxu0 0.0
    %115 = vmatpush1.msra.mxu0 0.0
    %116 = vmatprep.subr.mxu0 0.0
    %117 = vmatpush1.msra.mxu0 0.0
    %118 = vmatprep.subr.mxu0 0.0
    %119 = vmatpush1.msra.mxu0 0.0
    %120 = vmatprep.subr.mxu0 0.0
    %121 = vmatpush1.msra.mxu0 0.0
    %122 = vmatprep.subr.mxu0 0.0
    %123 = vmatpush1.msra.mxu0 0.0
    %124 = vmatprep.subr.mxu0 0.0
    %125 = vmatpush1.msra.mxu0 0.0
    %126 = vmatprep.mubr.f32.mxu0 0.0
    %127 = vmatmul.mubr.f32.gmra.mrb[0].mxu0 %v57
    %v128 = vpop.f32.mrb[0].mxu0
    %v129 = vadd.f32 0.0, %v128
    %v130 = vpop.f32.mrb[0].mxu0
    %131 = vmatprep.mubr.f32.mxu0 0.0
    %132 = vmatmul.mubr.f32.gmra.mrb[0].mxu0 %v60
    %v133 = vpop.f32.mrb[0].mxu0
    %v134 = vadd.f32 0.0, %v133
    %v135 = vpop.f32.mrb[0].mxu0
    %136 = vdwg.mxu0
    %v137 = vmul.f32 %v129, 5.656854
    %v138 = vmul.f32 %v134, 5.656854
    %v139 = vld [vmem:[%s2] sm:$0xff]
    %v140 = vld [vmem:[%s2 + $0x8] sm:$0xff]
    %v141 = vadd.f32 %v137, %v139
    %v142 = vadd.f32 %v138, %v140
    %v143 = vld [vmem:[%s3] sm:$0xff]
    %v144 = vld [vmem:[%s3 + $0x8] sm:$0xff]
    %v145 = vld [vmem:[#allocation2] sm:$0xff]
    %v146 = vld [vmem:[#allocation2 + $0x8] sm:$0xff]
    %v147 = vld [vmem:[#allocation2 + $0x10] sm:$0xff]
    %v148 = vld [vmem:[#allocation2 + $0x18] sm:$0xff]
    %v149 = vld [vmem:[#allocation2 + $0x20] sm:$0xff]
    %v150 = vld [vmem:[#allocation2 + $0x28] sm:$0xff]
    %v151 = vld [vmem:[#allocation2 + $0x30] sm:$0xff]
    %v152 = vld [vmem:[#allocation2 + $0x38] sm:$0xff]
    %v153 = vld [vmem:[#allocation2 + $0x40] sm:$0xff]
    %v154 = vld [vmem:[#allocation2 + $0x48] sm:$0xff]
    %v155 = vld [vmem:[#allocation2 + $0x50] sm:$0xff]
    %v156 = vld [vmem:[#allocation2 + $0x58] sm:$0xff]
    %v157 = vld [vmem:[#allocation2 + $0x60] sm:$0xff]
    %v158 = vld [vmem:[#allocation2 + $0x68] sm:$0xff]
    %v159 = vld [vmem:[#allocation2 + $0x70] sm:$0xff]
    %v160 = vld [vmem:[#allocation2 + $0x78] sm:$0xff]
    %v161 = vld [vmem:[#allocation2 + $0x80] sm:$0xff]
    %v162 = vld [vmem:[#allocation2 + $0x88] sm:$0xff]
    %v163 = vld [vmem:[#allocation2 + $0x90] sm:$0xff]
    %v164 = vld [vmem:[#allocation2 + $0x98] sm:$0xff]
    %v165 = vld [vmem:[%s5] sm:$0x1]
    %v166 = vld [vmem:[%s5 + $0x1] sm:$0x1]
    %v167 = vld [vmem:[%s5 + $0x2] sm:$0x1]
    %v168 = vld [vmem:[%s5 + $0x3] sm:$0x1]
    %v169 = vld [vmem:[%s5 + $0x4] sm:$0x1]
    %v170 = vld [vmem:[%s5 + $0x5] sm:$0x1]
    %v171 = vld [vmem:[%s5 + $0x6] sm:$0x1]
    %v172 = vld [vmem:[%s5 + $0x7] sm:$0x1]
    %vm173 = vcmask 261120
    %v174 = vsel %vm173, %v141, 0.0
    %175 = vadd.xlane.f32.xlu0 %v174
    %v176 = vpop.xlane.xlu0 %175
    %v177 = vsel %vm173, %v142, 0.0
    %178 = vadd.xlane.f32.xlu0 %v177
    %v179 = vpop.xlane.xlu0 %178
    %v180 = vrcp.pop 32.0
    %v181 = vmul.f32 %v176, %v180
    %v182 = vmul.f32 %v179, %v180
    %v183 = vsub.f32 %v141, %v181
    %v184 = vsub.f32 %v142, %v182
    %v185 = vmul.f32 %v183, %v183
    %v186 = vmul.f32 %v184, %v184
    %v187 = vsel %vm173, %v185, 0.0
    %188 = vadd.xlane.f32.xlu0 %v187
    %v189 = vpop.xlane.xlu0 %188
    %v190 = vsel %vm173, %v186, 0.0
    %191 = vadd.xlane.f32.xlu0 %v190
    %v192 = vpop.xlane.xlu0 %191
    %v193 = vmul.f32 %v189, %v180
    %v194 = vmul.f32 %v192, %v180
    %v195 = vadd.f32 %v193, 1e-05
    %v196 = vadd.f32 %v194, 1e-05
    %v197 = vrsqrt.pop %v195
    %v198 = vrsqrt.pop %v196
    %v199 = vmul.f32 %v183, %v197
    %v200 = vmul.f32 %v184, %v198
    %v201 = vlaneseq
    %v202 = vshrl.u32 %v201, 7
    %v203 = vsub.s32 0, %v202
    %v204 = vrot.slane %v165, %v203
    %v205 = vmul.f32 %v199, %v204
    %v206 = vmul.f32 %v200, %v204
    %v207 = vlaneseq
    %v208 = vshrl.u32 %v207, 7
    %v209 = vsub.s32 0, %v208
    %v210 = vrot.slane %v166, %v209
    %v211 = vadd.f32 %v205, %v210
    %v212 = vadd.f32 %v206, %v210
    %v213 = vlaneseq
    %v214 = vshrl.u32 %v213, 7
    %v215 = vsub.s32 0, %v214
    %v216 = vrot.slane %v167, %v215
    %v218 = vsel %vm173, %v211, 0
    %v221 = vsel %vm173, %v212, 0
    %223 = vmatprep.subr.mxu0 0.0
    %224 = vmatpush1.msra.mxu0 %v145
    %225 = vmatprep.subr.mxu0 0.0
    %226 = vmatpush1.msra.mxu0 %v146
    %227 = vmatprep.subr.mxu0 0.0
    %228 = vmatpush1.msra.mxu0 %v147
    %229 = vmatprep.subr.mxu0 0.0
    %230 = vmatpush1.msra.mxu0 %v148
    %231 = vmatprep.subr.mxu0 0.0
    %232 = vmatpush1.msra.mxu0 0.0
    %233 = vmatprep.subr.mxu0 0.0
    %234 = vmatpush1.msra.mxu0 0.0
    %235 = vmatprep.subr.mxu0 0.0
    %236 = vmatpush1.msra.mxu0 0.0
    %237 = vmatprep.subr.mxu0 0.0
    %238 = vmatpush1.msra.mxu0 0.0
    %239 = vmatprep.subr.mxu0 0.0
    %240 = vmatpush1.msra.mxu0 0.0
    %241 = vmatprep.subr.mxu0 0.0
    %242 = vmatpush1.msra.mxu0 0.0
    %243 = vmatprep.subr.mxu0 0.0
    %244 = vmatpush1.msra.mxu0 0.0
    %245 = vmatprep.subr.mxu0 0.0
    %246 = vmatpush1.msra.mxu0 0.0
    %247 = vmatprep.subr.mxu0 0.0
    %248 = vmatpush1.msra.mxu0 0.0
    %249 = vmatprep.subr.mxu0 0.0
    %250 = vmatpush1.msra.mxu0 0.0
    %251 = vmatprep.subr.mxu0 0.0
    %252 = vmatpush1.msra.mxu0 0.0
    %253 = vmatprep.subr.mxu0 0.0
    %254 = vmatpush1.msra.mxu0 0.0
    %255 = vmatprep.subr.mxu0 0.0
    %256 = vmatpush1.msra.mxu0 0.0
    %257 = vmatprep.subr.mxu0 0.0
    %258 = vmatpush1.msra.mxu0 0.0
    %259 = vmatprep.subr.mxu0 0.0
    %260 = vmatpush1.msra.mxu0 0.0
    %261 = vmatprep.subr.mxu0 0.0
    %262 = vmatpush1.msra.mxu0 0.0
    %263 = vmatprep.subr.mxu0 0.0
    %264 = vmatpush1.msra.mxu0 0.0
    %265 = vmatprep.subr.mxu0 0.0
    %266 = vmatpush1.msra.mxu0 0.0
    %267 = vmatprep.subr.mxu0 0.0
    %268 = vmatpush1.msra.mxu0 0.0
    %269 = vmatprep.subr.mxu0 0.0
    %270 = vmatpush1.msra.mxu0 0.0
    %271 = vmatprep.subr.mxu0 0.0
    %272 = vmatpush1.msra.mxu0 0.0
    %273 = vmatprep.subr.mxu0 0.0
    %274 = vmatpush1.msra.mxu0 0.0
    %275 = vmatprep.subr.mxu0 0.0
    %276 = vmatpush1.msra.mxu0 0.0
    %277 = vmatprep.subr.mxu0 0.0
    %278 = vmatpush1.msra.mxu0 0.0
    %279 = vmatprep.subr.mxu0 0.0
    %280 = vmatpush1.msra.mxu0 0.0
    %281 = vmatprep.subr.mxu0 0.0
    %282 = vmatpush1.msra.mxu0 0.0
    %283 = vmatprep.subr.mxu0 0.0
    %284 = vmatpush1.msra.mxu0 0.0
    %285 = vmatprep.subr.mxu0 0.0
    %286 = vmatpush1.msra.mxu0 0.0
    %287 = vmatprep.mubr.f32.mxu0 0.0
    %288 = vmatmul.mubr.f32.gmra.mrb[0].mxu0 %v218
    %v289 = vpop.f32.mrb[0].mxu0
    %v290 = vadd.f32 %v216, %v289
    %v291 = vpop.f32.mrb[0].mxu0
    %292 = vmatprep.mubr.f32.mxu0 0.0
    %293 = vmatmul.mubr.f32.gmra.mrb[0].mxu0 %v221
    %v294 = vpop.f32.mrb[0].mxu0
    %v295 = vadd.f32 %v216, %v294
    %v296 = vpop.f32.mrb[0].mxu0
    %297 = vdwg.mxu0
    %300 = vrot.lane.b32.xlu0 %v290, 96
    %v301 = vpop.permute.xlu0 %300
    %302 = vrot.lane.b32.xlu0 %v295, 96
    %v303 = vpop.permute.xlu0 %302
    %v304 = vsel %vm173, %v290, 0
    %v306 = vsel %vm173, %v295, 0
    %v308 = vsel %vm173, %v301, 0
    %v310 = vsel %vm173, %v303, 0
    %312 = vmatprep.subr.mxu0 0.0
    %313 = vmatpush1.xpose.msra.mxu0 %v308
    %314 = vmatprep.subr.mxu0 0.0
    %315 = vmatpush1.xpose.msra.mxu0 %v310
    %316 = vmatprep.subr.mxu0 0.0
    %317 = vmatpush1.xpose.msra.mxu0 0.0
    %318 = vmatprep.subr.mxu0 0.0
    %319 = vmatpush1.xpose.msra.mxu0 0.0
    %320 = vmatprep.subr.mxu0 0.0
    %321 = vmatpush1.xpose.msra.mxu0 0.0
    %322 = vmatprep.subr.mxu0 0.0
    %323 = vmatpush1.xpose.msra.mxu0 0.0
    %324 = vmatprep.subr.mxu0 0.0
    %325 = vmatpush1.xpose.msra.mxu0 0.0
    %326 = vmatprep.subr.mxu0 0.0
    %327 = vmatpush1.xpose.msra.mxu0 0.0
    %328 = vmatprep.subr.mxu0 0.0
    %329 = vmatpush1.xpose.msra.mxu0 0.0
    %330 = vmatprep.subr.mxu0 0.0
    %331 = vmatpush1.xpose.msra.mxu0 0.0
    %332 = vmatprep.subr.mxu0 0.0
    %333 = vmatpush1.xpose.msra.mxu0 0.0
    %334 = vmatprep.subr.mxu0 0.0
    %335 = vmatpush1.xpose.msra.mxu0 0.0
    %336 = vmatprep.subr.mxu0 0.0
    %337 = vmatpush1.xpose.msra.mxu0 0.0
    %338 = vmatprep.subr.mxu0 0.0
    %339 = vmatpush1.xpose.msra.mxu0 0.0
    %340 = vmatprep.subr.mxu0 0.0
    %341 = vmatpush1.xpose.msra.mxu0 0.0
    %342 = vmatprep.subr.mxu0 0.0
    %343 = vmatpush1.xpose.msra.mxu0 0.0
    %344 = vmatprep.subr.mxu0 0.0
    %345 = vmatpush1.xpose.msra.mxu0 0.0
    %346 = vmatprep.subr.mxu0 0.0
    %347 = vmatpush1.xpose.msra.mxu0 0.0
    %348 = vmatprep.subr.mxu0 0.0
    %349 = vmatpush1.xpose.msra.mxu0 0.0
    %350 = vmatprep.subr.mxu0 0.0
    %351 = vmatpush1.xpose.msra.mxu0 0.0
    %352 = vmatprep.subr.mxu0 0.0
    %353 = vmatpush1.xpose.msra.mxu0 0.0
    %354 = vmatprep.subr.mxu0 0.0
    %355 = vmatpush1.xpose.msra.mxu0 0.0
    %356 = vmatprep.subr.mxu0 0.0
    %357 = vmatpush1.xpose.msra.mxu0 0.0
    %358 = vmatprep.subr.mxu0 0.0
    %359 = vmatpush1.xpose.msra.mxu0 0.0
    %360 = vmatprep.subr.mxu0 0.0
    %361 = vmatpush1.xpose.msra.mxu0 0.0
    %362 = vmatprep.subr.mxu0 0.0
    %363 = vmatpush1.xpose.msra.mxu0 0.0
    %364 = vmatprep.subr.mxu0 0.0
    %365 = vmatpush1.xpose.msra.mxu0 0.0
    %366 = vmatprep.subr.mxu0 0.0
    %367 = vmatpush1.xpose.msra.mxu0 0.0
    %368 = vmatprep.subr.mxu0 0.0
    %369 = vmatpush1.xpose.msra.mxu0 0.0
    %370 = vmatprep.subr.mxu0 0.0
    %371 = vmatpush1.xpose.msra.mxu0 0.0
    %372 = vmatprep.subr.mxu0 0.0
    %373 = vmatpush1.xpose.msra.mxu0 0.0
    %374 = vmatprep.subr.mxu0 0.0
    %375 = vmatpush1.xpose.msra.mxu0 0.0
    %376 = vmatprep.mubr.f32.mxu0 0.0
    %377 = vmatmul.mubr.f32.gmra.mrb[0].mxu0 %v304
    %v378 = vpop.f32.mrb[0].mxu0
    %v379 = vadd.f32 0.0, %v378
    %v380 = vpop.f32.mrb[0].mxu0
    %381 = vmatprep.mubr.f32.mxu0 0.0
    %382 = vmatmul.mubr.f32.gmra.mrb[0].mxu0 %v306
    %v383 = vpop.f32.mrb[0].mxu0
    %v384 = vadd.f32 0.0, %v383
    %v385 = vpop.f32.mrb[0].mxu0
    %386 = vdwg.mxu0
    %v387 = vmul.f32 %v379, 0.17677669
    %v388 = vmul.f32 %v384, 0.17677669
    %v389 = vadd.f32 %v387, %v143
    %v390 = vadd.f32 %v388, %v144
    %vm391 = vcmask 130048
    %v392 = vsel %vm391, %v389, -inf
    %393 = vmax.xlane.f32.xlu0 %v392
    %v394 = vpop.xlane.xlu0 %393
    %v395 = vsel %vm391, %v390, -inf
    %396 = vmax.xlane.f32.xlu0 %v395
    %v397 = vpop.xlane.xlu0 %396
    %v398 = vsub.f32 %v389, %v394
    %v399 = vsub.f32 %v390, %v397
    %v400 = vmul.f32 %v398, 1.442695
    %v401 = vpow.pop %v400
    %v402 = vmul.f32 %v399, 1.442695
    %v403 = vpow.pop %v402
    %v404 = vsel %vm391, %v401, 0.0
    %405 = vadd.xlane.f32.xlu0 %v404
    %v406 = vpop.xlane.xlu0 %405
    %v407 = vsel %vm391, %v403, 0.0
    %408 = vadd.xlane.f32.xlu0 %v407
    %v409 = vpop.xlane.xlu0 %408
    %v410 = vrcp.pop %v406
    %v411 = vrcp.pop %v409
    %v412 = vmul.f32 %v401, %v410
    %v413 = vmul.f32 %v403, %v411
    %414 = vst.msk [vmem:[%s9] sm:$0xff] %vm391, %v412
    %415 = vst.msk [vmem:[%s9 + $0x8] sm:$0xff] %vm391, %v413
    %416 = vrot.lane.b32.xlu0 %v290, 64
    %v417 = vpop.permute.xlu0 %416
    %418 = vrot.lane.b32.xlu0 %v295, 64
    %v419 = vpop.permute.xlu0 %418
    %v423 = vsel %vm391, %v412, 0
    %v426 = vsel %vm391, %v413, 0
    %428 = vmatprep.subr.mxu0 0.0
    %429 = vmatpush1.msra.mxu0 %v417
    %430 = vmatprep.subr.mxu0 0.0
    %431 = vmatpush1.msra.mxu0 %v419
    %432 = vmatprep.subr.mxu0 0.0
    %433 = vmatpush1.msra.mxu0 0.0
    %434 = vmatprep.subr.mxu0 0.0
    %435 = vmatpush1.msra.mxu0 0.0
    %436 = vmatprep.subr.mxu0 0.0
    %437 = vmatpush1.msra.mxu0 0.0
    %438 = vmatprep.subr.mxu0 0.0
    %439 = vmatpush1.msra.mxu0 0.0
    %440 = vmatprep.subr.mxu0 0.0
    %441 = vmatpush1.msra.mxu0 0.0
    %442 = vmatprep.subr.mxu0 0.0
    %443 = vmatpush1.msra.mxu0 0.0
    %444 = vmatprep.subr.mxu0 0.0
    %445 = vmatpush1.msra.mxu0 0.0
    %446 = vmatprep.subr.mxu0 0.0
    %447 = vmatpush1.msra.mxu0 0.0
    %448 = vmatprep.subr.mxu0 0.0
    %449 = vmatpush1.msra.mxu0 0.0
    %450 = vmatprep.subr.mxu0 0.0
    %451 = vmatpush1.msra.mxu0 0.0
    %452 = vmatprep.subr.mxu0 0.0
    %453 = vmatpush1.msra.mxu0 0.0
    %454 = vmatprep.subr.mxu0 0.0
    %455 = vmatpush1.msra.mxu0 0.0
    %456 = vmatprep.subr.mxu0 0.0
    %457 = vmatpush1.msra.mxu0 0.0
    %458 = vmatprep.subr.mxu0 0.0
    %459 = vmatpush1.msra.mxu0 0.0
    %460 = vmatprep.subr.mxu0 0.0
    %461 = vmatpush1.msra.mxu0 0.0
    %462 = vmatprep.subr.mxu0 0.0
    %463 = vmatpush1.msra.mxu0 0.0
    %464 = vmatprep.subr.mxu0 0.0
    %465 = vmatpush1.msra.mxu0 0.0
    %466 = vmatprep.subr.mxu0 0.0
    %467 = vmatpush1.msra.mxu0 0.0
    %468 = vmatprep.subr.mxu0 0.0
    %469 = vmatpush1.msra.mxu0 0.0
    %470 = vmatprep.subr.mxu0 0.0
    %471 = vmatpush1.msra.mxu0 0.0
    %472 = vmatprep.subr.mxu0 0.0
    %473 = vmatpush1.msra.mxu0 0.0
    %474 = vmatprep.subr.mxu0 0.0
    %475 = vmatpush1.msra.mxu0 0.0
    %476 = vmatprep.subr.mxu0 0.0
    %477 = vmatpush1.msra.mxu0 0.0
    %478 = vmatprep.subr.mxu0 0.0
    %479 = vmatpush1.msra.mxu0 0.0
    %480 = vmatprep.subr.mxu0 0.0
    %481 = vmatpush1.msra.mxu0 0.0
    %482 = vmatprep.subr.mxu0 0.0
    %483 = vmatpush1.msra.mxu0 0.0
    %484 = vmatprep.subr.mxu0 0.0
    %485 = vmatpush1.msra.mxu0 0.0
    %486 = vmatprep.subr.mxu0 0.0
    %487 = vmatpush1.msra.mxu0 0.0
    %488 = vmatprep.subr.mxu0 0.0
    %489 = vmatpush1.msra.mxu0 0.0
    %490 = vmatprep.subr.mxu0 0.0
    %491 = vmatpush1.msra.mxu0 0.0
    %492 = vmatprep.mubr.f32.mxu0 0.0
    %493 = vmatmul.mubr.f32.gmra.mrb[0].mxu0 %v423
    %v494 = vpop.f32.mrb[0].mxu0
    %v495 = vadd.f32 0.0, %v494
    %v496 = vpop.f32.mrb[0].mxu0
    %497 = vmatprep.mubr.f32.mxu0 0.0
    %498 = vmatmul.mubr.f32.gmra.mrb[0].mxu0 %v426
    %v499 = vpop.f32.mrb[0].mxu0
    %v500 = vadd.f32 0.0, %v499
    %v501 = vpop.f32.mrb[0].mxu0
    %502 = vdwg.mxu0
    %v503 = vlaneseq
    %v504 = vshrl.u32 %v503, 7
    %v505 = vsub.s32 0, %v504
    %v506 = vrot.slane %v168, %v505
    %v508 = vsel %vm173, %v495, 0
    %v511 = vsel %vm173, %v500, 0
    %513 = vmatprep.subr.mxu0 0.0
    %514 = vmatpush1.msra.mxu0 %v149
    %515 = vmatprep.subr.mxu0 0.0
    %516 = vmatpush1.msra.mxu0 %v150
    %517 = vmatprep.subr.mxu0 0.0
    %518 = vmatpush1.msra.mxu0 %v151
    %519 = vmatprep.subr.mxu0 0.0
    %520 = vmatpush1.msra.mxu0 %v152
    %521 = vmatprep.subr.mxu0 0.0
    %522 = vmatpush1.msra.mxu0 0.0
    %523 = vmatprep.subr.mxu0 0.0
    %524 = vmatpush1.msra.mxu0 0.0
    %525 = vmatprep.subr.mxu0 0.0
    %526 = vmatpush1.msra.mxu0 0.0
    %527 = vmatprep.subr.mxu0 0.0
    %528 = vmatpush1.msra.mxu0 0.0
    %529 = vmatprep.subr.mxu0 0.0
    %530 = vmatpush1.msra.mxu0 0.0
    %531 = vmatprep.subr.mxu0 0.0
    %532 = vmatpush1.msra.mxu0 0.0
    %533 = vmatprep.subr.mxu0 0.0
    %534 = vmatpush1.msra.mxu0 0.0
    %535 = vmatprep.subr.mxu0 0.0
    %536 = vmatpush1.msra.mxu0 0.0
    %537 = vmatprep.subr.mxu0 0.0
    %538 = vmatpush1.msra.mxu0 0.0
    %539 = vmatprep.subr.mxu0 0.0
    %540 = vmatpush1.msra.mxu0 0.0
    %541 = vmatprep.subr.mxu0 0.0
    %542 = vmatpush1.msra.mxu0 0.0
    %543 = vmatprep.subr.mxu0 0.0
    %544 = vmatpush1.msra.mxu0 0.0
    %545 = vmatprep.subr.mxu0 0.0
    %546 = vmatpush1.msra.mxu0 0.0
    %547 = vmatprep.subr.mxu0 0.0
    %548 = vmatpush1.msra.mxu0 0.0
    %549 = vmatprep.subr.mxu0 0.0
    %550 = vmatpush1.msra.mxu0 0.0
    %551 = vmatprep.subr.mxu0 0.0
    %552 = vmatpush1.msra.mxu0 0.0
    %553 = vmatprep.subr.mxu0 0.0
    %554 = vmatpush1.msra.mxu0 0.0
    %555 = vmatprep.subr.mxu0 0.0
    %556 = vmatpush1.msra.mxu0 0.0
    %557 = vmatprep.subr.mxu0 0.0
    %558 = vmatpush1.msra.mxu0 0.0
    %559 = vmatprep.subr.mxu0 0.0
    %560 = vmatpush1.msra.mxu0 0.0
    %561 = vmatprep.subr.mxu0 0.0
    %562 = vmatpush1.msra.mxu0 0.0
    %563 = vmatprep.subr.mxu0 0.0
    %564 = vmatpush1.msra.mxu0 0.0
    %565 = vmatprep.subr.mxu0 0.0
    %566 = vmatpush1.msra.mxu0 0.0
    %567 = vmatprep.subr.mxu0 0.0
    %568 = vmatpush1.msra.mxu0 0.0
    %569 = vmatprep.subr.mxu0 0.0
    %570 = vmatpush1.msra.mxu0 0.0
    %571 = vmatprep.subr.mxu0 0.0
    %572 = vmatpush1.msra.mxu0 0.0
    %573 = vmatprep.subr.mxu0 0.0
    %574 = vmatpush1.msra.mxu0 0.0
    %575 = vmatprep.subr.mxu0 0.0
    %576 = vmatpush1.msra.mxu0 0.0
    %577 = vmatprep.mubr.f32.mxu0 0.0
    %578 = vmatmul.mubr.f32.gmra.mrb[0].mxu0 %v508
    %v579 = vpop.f32.mrb[0].mxu0
    %v580 = vadd.f32 %v506, %v579
    %v581 = vpop.f32.mrb[0].mxu0
    %582 = vmatprep.mubr.f32.mxu0 0.0
    %583 = vmatmul.mubr.f32.gmra.mrb[0].mxu0 %v511
    %v584 = vpop.f32.mrb[0].mxu0
    %v585 = vadd.f32 %v506, %v584
    %v586 = vpop.f32.mrb[0].mxu0
    %587 = vdwg.mxu0
    %v588 = vadd.f32 %v141, %v580
    %v589 = vadd.f32 %v142, %v585
    %v590 = vsel %vm173, %v588, 0.0
    %591 = vadd.xlane.f32.xlu0 %v590
    %v592 = vpop.xlane.xlu0 %591
    %v593 = vsel %vm173, %v589, 0.0
    %594 = vadd.xlane.f32.xlu0 %v593
    %v595 = vpop.xlane.xlu0 %594
    %v596 = vmul.f32 %v592, %v180
    %v597 = vmul.f32 %v595, %v180
    %v598 = vsub.f32 %v588, %v596
    %v599 = vsub.f32 %v589, %v597
    %v600 = vmul.f32 %v598, %v598
    %v601 = vmul.f32 %v599, %v599
    %v602 = vsel %vm173, %v600, 0.0
    %603 = vadd.xlane.f32.xlu0 %v602
    %v604 = vpop.xlane.xlu0 %603
    %v605 = vsel %vm173, %v601, 0.0
    %606 = vadd.xlane.f32.xlu0 %v605
    %v607 = vpop.xlane.xlu0 %606
    %v608 = vmul.f32 %v604, %v180
    %v609 = vmul.f32 %v607, %v180
    %v610 = vadd.f32 %v608, 1e-05
    %v611 = vadd.f32 %v609, 1e-05
    %v612 = vrsqrt.pop %v610
    %v613 = vrsqrt.pop %v611
    %v614 = vmul.f32 %v598, %v612
    %v615 = vmul.f32 %v599, %v613
    %v616 = vlaneseq
    %v617 = vshrl.u32 %v616, 7
    %v618 = vsub.s32 0, %v617
    %v619 = vrot.slane %v169, %v618
    %v620 = vmul.f32 %v614, %v619
    %v621 = vmul.f32 %v615, %v619
    %v622 = vlaneseq
    %v623 = vshrl.u32 %v622, 7
    %v624 = vsub.s32 0, %v623
    %v625 = vrot.slane %v170, %v624
    %v626 = vadd.f32 %v620, %v625
    %v627 = vadd.f32 %v621, %v625
    %v628 = vlaneseq
    %v629 = vshrl.u32 %v628, 7
    %v630 = vsub.s32 0, %v629
    %v631 = vrot.slane %v171, %v630
    %v633 = vsel %vm173, %v626, 0
    %v636 = vsel %vm173, %v627, 0
    %638 = vmatprep.subr.mxu0 0.0
    %639 = vmatpush1.msra.mxu0 %v153
    %640 = vmatprep.subr.mxu0 0.0
    %641 = vmatpush1.msra.mxu0 %v154
    %642 = vmatprep.subr.mxu0 0.0
    %643 = vmatpush1.msra.mxu0 %v155
    %644 = vmatprep.subr.mxu0 0.0
    %645 = vmatpush1.msra.mxu0 %v156
    %646 = vmatprep.subr.mxu0 0.0
    %647 = vmatpush1.msra.mxu0 0.0
    %648 = vmatprep.subr.mxu0 0.0
    %649 = vmatpush1.msra.mxu0 0.0
    %650 = vmatprep.subr.mxu0 0.0
    %651 = vmatpush1.msra.mxu0 0.0
    %652 = vmatprep.subr.mxu0 0.0
    %653 = vmatpush1.msra.mxu0 0.0
    %654 = vmatprep.subr.mxu0 0.0
    %655 = vmatpush1.msra.mxu0 0.0
    %656 = vmatprep.subr.mxu0 0.0
    %657 = vmatpush1.msra.mxu0 0.0
    %658 = vmatprep.subr.mxu0 0.0
    %659 = vmatpush1.msra.mxu0 0.0
    %660 = vmatprep.subr.mxu0 0.0
    %661 = vmatpush1.msra.mxu0 0.0
    %662 = vmatprep.subr.mxu0 0.0
    %663 = vmatpush1.msra.mxu0 0.0
    %664 = vmatprep.subr.mxu0 0.0
    %665 = vmatpush1.msra.mxu0 0.0
    %666 = vmatprep.subr.mxu0 0.0
    %667 = vmatpush1.msra.mxu0 0.0
    %668 = vmatprep.subr.mxu0 0.0
    %669 = vmatpush1.msra.mxu0 0.0
    %670 = vmatprep.subr.mxu0 0.0
    %671 = vmatpush1.msra.mxu0 0.0
    %672 = vmatprep.subr.mxu0 0.0
    %673 = vmatpush1.msra.mxu0 0.0
    %674 = vmatprep.subr.mxu0 0.0
    %675 = vmatpush1.msra.mxu0 0.0
    %676 = vmatprep.subr.mxu0 0.0
    %677 = vmatpush1.msra.mxu0 0.0
    %678 = vmatprep.subr.mxu0 0.0
    %679 = vmatpush1.msra.mxu0 0.0
    %680 = vmatprep.subr.mxu0 0.0
    %681 = vmatpush1.msra.mxu0 0.0
    %682 = vmatprep.subr.mxu0 0.0
    %683 = vmatpush1.msra.mxu0 0.0
    %684 = vmatprep.subr.mxu0 0.0
    %685 = vmatpush1.msra.mxu0 0.0
    %686 = vmatprep.subr.mxu0 0.0
    %687 = vmatpush1.msra.mxu0 0.0
    %688 = vmatprep.subr.mxu0 0.0
    %689 = vmatpush1.msra.mxu0 0.0
    %690 = vmatprep.subr.mxu0 0.0
    %691 = vmatpush1.msra.mxu0 0.0
    %692 = vmatprep.subr.mxu0 0.0
    %693 = vmatpush1.msra.mxu0 0.0
    %694 = vmatprep.subr.mxu0 0.0
    %695 = vmatpush1.msra.mxu0 0.0
    %696 = vmatprep.subr.mxu0 0.0
    %697 = vmatpush1.msra.mxu0 0.0
    %698 = vmatprep.subr.mxu0 0.0
    %699 = vmatpush1.msra.mxu0 0.0
    %700 = vmatprep.subr.mxu0 0.0
    %701 = vmatpush1.msra.mxu0 0.0
    %702 = vmatprep.mubr.f32.mxu0 0.0
    %703 = vmatmul.mubr.f32.gmra.mrb[0].mxu0 %v633
    %v704 = vpop.f32.mrb[0].mxu0
    %v705 = vadd.f32 %v631, %v704
    %v706 = vpop.f32.mrb[0].mxu0
    %707 = vmatprep.mubr.f32.mxu0 0.0
    %708 = vmatmul.mubr.f32.gmra.mrb[0].mxu0 %v636
    %v709 = vpop.f32.mrb[0].mxu0
    %v710 = vadd.f32 %v631, %v709
    %v711 = vpop.f32.mrb[0].mxu0
    %712 = vdwg.mxu0
    %v713 = vmax.f32 %v705, 0.0
    %v714 = vmax.f32 %v710, 0.0
    %v715 = vlaneseq
    %v716 = vshrl.u32 %v715, 7
    %v717 = vsub.s32 0, %v716
    %v718 = vrot.slane %v172, %v717
    %v720 = vsel %vm55, %v713, 0
    %v723 = vsel %vm55, %v714, 0
    %725 = vmatprep.subr.mxu0 0.0
    %726 = vmatpush1.msra.mxu0 %v157
    %727 = vmatprep.subr.mxu0 0.0
    %728 = vmatpush1.msra.mxu0 %v158
    %729 = vmatprep.subr.mxu0 0.0
    %730 = vmatpush1.msra.mxu0 %v159
    %731 = vmatprep.subr.mxu0 0.0
    %732 = vmatpush1.msra.mxu0 %v160
    %733 = vmatprep.subr.mxu0 0.0
    %734 = vmatpush1.msra.mxu0 %v161
    %735 = vmatprep.subr.mxu0 0.0
    %736 = vmatpush1.msra.mxu0 %v162
    %737 = vmatprep.subr.mxu0 0.0
    %738 = vmatpush1.msra.mxu0 %v163
    %739 = vmatprep.subr.mxu0 0.0
    %740 = vmatpush1.msra.mxu0 %v164
    %741 = vmatprep.subr.mxu0 0.0
    %742 = vmatpush1.msra.mxu0 0.0
    %743 = vmatprep.subr.mxu0 0.0
    %744 = vmatpush1.msra.mxu0 0.0
    %745 = vmatprep.subr.mxu0 0.0
    %746 = vmatpush1.msra.mxu0 0.0
    %747 = vmatprep.subr.mxu0 0.0
    %748 = vmatpush1.msra.mxu0 0.0
    %749 = vmatprep.subr.mxu0 0.0
    %750 = vmatpush1.msra.mxu0 0.0
    %751 = vmatprep.subr.mxu0 0.0
    %752 = vmatpush1.msra.mxu0 0.0
    %753 = vmatprep.subr.mxu0 0.0
    %754 = vmatpush1.msra.mxu0 0.0
    %755 = vmatprep.subr.mxu0 0.0
    %756 = vmatpush1.msra.mxu0 0.0
    %757 = vmatprep.subr.mxu0 0.0
    %758 = vmatpush1.msra.mxu0 0.0
    %759 = vmatprep.subr.mxu0 0.0
    %760 = vmatpush1.msra.mxu0 0.0
    %761 = vmatprep.subr.mxu0 0.0
    %762 = vmatpush1.msra.mxu0 0.0
    %763 = vmatprep.subr.mxu0 0.0
    %764 = vmatpush1.msra.mxu0 0.0
    %765 = vmatprep.subr.mxu0 0.0
    %766 = vmatpush1.msra.mxu0 0.0
    %767 = vmatprep.subr.mxu0 0.0
    %768 = vmatpush1.msra.mxu0 0.0
    %769 = vmatprep.subr.mxu0 0.0
    %770 = vmatpush1.msra.mxu0 0.0
    %771 = vmatprep.subr.mxu0 0.0
    %772 = vmatpush1.msra.mxu0 0.0
    %773 = vmatprep.subr.mxu0 0.0
    %774 = vmatpush1.msra.mxu0 0.0
    %775 = vmatprep.subr.mxu0 0.0
    %776 = vmatpush1.msra.mxu0 0.0
    %777 = vmatprep.subr.mxu0 0.0
    %778 = vmatpush1.msra.mxu0 0.0
    %779 = vmatprep.subr.mxu0 0.0
    %780 = vmatpush1.msra.mxu0 0.0
    %781 = vmatprep.subr.mxu0 0.0
    %782 = vmatpush1.msra.mxu0 0.0
    %783 = vmatprep.subr.mxu0 0.0
    %784 = vmatpush1.msra.mxu0 0.0
    %785 = vmatprep.subr.mxu0 0.0
    %786 = vmatpush1.msra.mxu0 0.0
    %787 = vmatprep.subr.mxu0 0.0
    %788 = vmatpush1.msra.mxu0 0.0
    %789 = vmatprep.mubr.f32.mxu0 0.0
    %790 = vmatmul.mubr.f32.gmra.mrb[0].mxu0 %v720
    %v791 = vpop.f32.mrb[0].mxu0
    %v792 = vadd.f32 %v718, %v791
    %v793 = vpop.f32.mrb[0].mxu0
    %794 = vmatprep.mubr.f32.mxu0 0.0
    %795 = vmatmul.mubr.f32.gmra.mrb[0].mxu0 %v723
    %v796 = vpop.f32.mrb[0].mxu0
    %v797 = vadd.f32 %v718, %v796
    %v798 = vpop.f32.mrb[0].mxu0
    %799 = vdwg.mxu0
    %v800 = vadd.f32 %v588, %v792
    %v801 = vadd.f32 %v589, %v797
    %s802 = scalar_lea.vmem [#allocation2], 160
    %v803 = vld [vmem:[%s802] sm:$0xff]
    %v804 = vld [vmem:[%s802 + $0x8] sm:$0xff]
    %v805 = vld [vmem:[%s802 + $0x10] sm:$0xff]
    %v806 = vld [vmem:[%s802 + $0x18] sm:$0xff]
    %v807 = vld [vmem:[%s802 + $0x20] sm:$0xff]
    %v808 = vld [vmem:[%s802 + $0x28] sm:$0xff]
    %v809 = vld [vmem:[%s802 + $0x30] sm:$0xff]
    %v810 = vld [vmem:[%s802 + $0x38] sm:$0xff]
    %v811 = vld [vmem:[%s802 + $0x40] sm:$0xff]
    %v812 = vld [vmem:[%s802 + $0x48] sm:$0xff]
    %v813 = vld [vmem:[%s802 + $0x50] sm:$0xff]
    %v814 = vld [vmem:[%s802 + $0x58] sm:$0xff]
    %v815 = vld [vmem:[%s802 + $0x60] sm:$0xff]
    %v816 = vld [vmem:[%s802 + $0x68] sm:$0xff]
    %v817 = vld [vmem:[%s802 + $0x70] sm:$0xff]
    %v818 = vld [vmem:[%s802 + $0x78] sm:$0xff]
    %v819 = vld [vmem:[%s802 + $0x80] sm:$0xff]
    %v820 = vld [vmem:[%s802 + $0x88] sm:$0xff]
    %v821 = vld [vmem:[%s802 + $0x90] sm:$0xff]
    %v822 = vld [vmem:[%s802 + $0x98] sm:$0xff]
    %s823 = scalar_lea.vmem %s5, 8
    %v824 = vld [vmem:[%s823] sm:$0x1]
    %v825 = vld [vmem:[%s823 + $0x1] sm:$0x1]
    %v826 = vld [vmem:[%s823 + $0x2] sm:$0x1]
    %v827 = vld [vmem:[%s823 + $0x3] sm:$0x1]
    %v828 = vld [vmem:[%s823 + $0x4] sm:$0x1]
    %v829 = vld [vmem:[%s823 + $0x5] sm:$0x1]
    %v830 = vld [vmem:[%s823 + $0x6] sm:$0x1]
    %v831 = vld [vmem:[%s823 + $0x7] sm:$0x1]
    %v832 = vsel %vm173, %v800, 0.0
    %833 = vadd.xlane.f32.xlu0 %v832
    %v834 = vpop.xlane.xlu0 %833
    %v835 = vsel %vm173, %v801, 0.0
    %836 = vadd.xlane.f32.xlu0 %v835
    %v837 = vpop.xlane.xlu0 %836
    %v838 = vmul.f32 %v834, %v180
    %v839 = vmul.f32 %v837, %v180
    %v840 = vsub.f32 %v800, %v838
    %v841 = vsub.f32 %v801, %v839
    %v842 = vmul.f32 %v840, %v840
    %v843 = vmul.f32 %v841, %v841
    %v844 = vsel %vm173, %v842, 0.0
    %845 = vadd.xlane.f32.xlu0 %v844
    %v846 = vpop.xlane.xlu0 %845
    %v847 = vsel %vm173, %v843, 0.0
    %848 = vadd.xlane.f32.xlu0 %v847
    %v849 = vpop.xlane.xlu0 %848
    %v850 = vmul.f32 %v846, %v180
    %v851 = vmul.f32 %v849, %v180
    %v852 = vadd.f32 %v850, 1e-05
    %v853 = vadd.f32 %v851, 1e-05
    %v854 = vrsqrt.pop %v852
    %v855 = vrsqrt.pop %v853
    %v856 = vmul.f32 %v840, %v854
    %v857 = vmul.f32 %v841, %v855
    %v858 = vlaneseq
    %v859 = vshrl.u32 %v858, 7
    %v860 = vsub.s32 0, %v859
    %v861 = vrot.slane %v824, %v860
    %v862 = vmul.f32 %v856, %v861
    %v863 = vmul.f32 %v857, %v861
    %v864 = vlaneseq
    %v865 = vshrl.u32 %v864, 7
    %v866 = vsub.s32 0, %v865
    %v867 = vrot.slane %v825, %v866
    %v868 = vadd.f32 %v862, %v867
    %v869 = vadd.f32 %v863, %v867
    %v870 = vlaneseq
    %v871 = vshrl.u32 %v870, 7
    %v872 = vsub.s32 0, %v871
    %v873 = vrot.slane %v826, %v872
    %v875 = vsel %vm173, %v868, 0
    %v878 = vsel %vm173, %v869, 0
    %880 = vmatprep.subr.mxu0 0.0
    %881 = vmatpush1.msra.mxu0 %v803
    %882 = vmatprep.subr.mxu0 0.0
    %883 = vmatpush1.msra.mxu0 %v804
    %884 = vmatprep.subr.mxu0 0.0
    %885 = vmatpush1.msra.mxu0 %v805
    %886 = vmatprep.subr.mxu0 0.0
    %887 = vmatpush1.msra.mxu0 %v806
    %888 = vmatprep.subr.mxu0 0.0
    %889 = vmatpush1.msra.mxu0 0.0
    %890 = vmatprep.subr.mxu0 0.0
    %891 = vmatpush1.msra.mxu0 0.0
    %892 = vmatprep.subr.mxu0 0.0
    %893 = vmatpush1.msra.mxu0 0.0
    %894 = vmatprep.subr.mxu0 0.0
    %895 = vmatpush1.msra.mxu0 0.0
    %896 = vmatprep.subr.mxu0 0.0
    %897 = vmatpush1.msra.mxu0 0.0
    %898 = vmatprep.subr.mxu0 0.0
    %899 = vmatpush1.msra.mxu0 0.0
    %900 = vmatprep.subr.mxu0 0.0
    %901 = vmatpush1.msra.mxu0 0.0
    %902 = vmatprep.subr.mxu0 0.0
    %903 = vmatpush1.msra.mxu0 0.0
    %904 = vmatprep.subr.mxu0 0.0
    %905 = vmatpush1.msra.mxu0 0.0
    %906 = vmatprep.subr.mxu0 0.0
    %907 = vmatpush1.msra.mxu0 0.0
    %908 = vmatprep.subr.mxu0 0.0
    %909 = vmatpush1.msra.mxu0 0.0
    %910 = vmatprep.subr.mxu0 0.0
    %911 = vmatpush1.msra.mxu0 0.0
    %912 = vmatprep.subr.mxu0 0.0
    %913 = vmatpush1.msra.mxu0 0.0
    %914 = vmatprep.subr.mxu0 0.0
    %915 = vmatpush1.msra.mxu0 0.0
    %916 = vmatprep.subr.mxu0 0.0
    %917 = vmatpush1.msra.mxu0 0.0
    %918 = vmatprep.subr.mxu0 0.0
    %919 = vmatpush1.msra.mxu0 0.0
    %920 = vmatprep.subr.mxu0 0.0
    %921 = vmatpush1.msra.mxu0 0.0
    %922 = vmatprep.subr.mxu0 0.0
    %923 = vmatpush1.msra.mxu0 0.0
    %924 = vmatprep.subr.mxu0 0.0
    %925 = vmatpush1.msra.mxu0 0.0
    %926 = vmatprep.subr.mxu0 0.0
    %927 = vmatpush1.msra.mxu0 0.0
    %928 = vmatprep.subr.mxu0 0.0
    %929 = vmatpush1.msra.mxu0 0.0
    %930 = vmatprep.subr.mxu0 0.0
    %931 = vmatpush1.msra.mxu0 0.0
    %932 = vmatprep.subr.mxu0 0.0
    %933 = vmatpush1.msra.mxu0 0.0
    %934 = vmatprep.subr.mxu0 0.0
    %935 = vmatpush1.msra.mxu0 0.0
    %936 = vmatprep.subr.mxu0 0.0
    %937 = vmatpush1.msra.mxu0 0.0
    %938 = vmatprep.subr.mxu0 0.0
    %939 = vmatpush1.msra.mxu0 0.0
    %940 = vmatprep.subr.mxu0 0.0
    %941 = vmatpush1.msra.mxu0 0.0
    %942 = vmatprep.subr.mxu0 0.0
    %943 = vmatpush1.msra.mxu0 0.0
    %944 = vmatprep.mubr.f32.mxu0 0.0
    %945 = vmatmul.mubr.f32.gmra.mrb[0].mxu0 %v875
    %v946 = vpop.f32.mrb[0].mxu0
    %v947 = vadd.f32 %v873, %v946
    %v948 = vpop.f32.mrb[0].mxu0
    %949 = vmatprep.mubr.f32.mxu0 0.0
    %950 = vmatmul.mubr.f32.gmra.mrb[0].mxu0 %v878
    %v951 = vpop.f32.mrb[0].mxu0
    %v952 = vadd.f32 %v873, %v951
    %v953 = vpop.f32.mrb[0].mxu0
    %954 = vdwg.mxu0
    %957 = vrot.lane.b32.xlu0 %v947, 96
    %v958 = vpop.permute.xlu0 %957
    %959 = vrot.lane.b32.xlu0 %v952, 96
    %v960 = vpop.permute.xlu0 %959
    %v961 = vsel %vm173, %v947, 0
    %v963 = vsel %vm173, %v952, 0
    %v965 = vsel %vm173, %v958, 0
    %v967 = vsel %vm173, %v960, 0
    %969 = vmatprep.subr.mxu0 0.0
    %970 = vmatpush1.xpose.msra.mxu0 %v965
    %971 = vmatprep.subr.mxu0 0.0
    %972 = vmatpush1.xpose.msra.mxu0 %v967
    %973 = vmatprep.subr.mxu0 0.0
    %974 = vmatpush1.xpose.msra.mxu0 0.0
    %975 = vmatprep.subr.mxu0 0.0
    %976 = vmatpush1.xpose.msra.mxu0 0.0
    %977 = vmatprep.subr.mxu0 0.0
    %978 = vmatpush1.xpose.msra.mxu0 0.0
    %979 = vmatprep.subr.mxu0 0.0
    %980 = vmatpush1.xpose.msra.mxu0 0.0
    %981 = vmatprep.subr.mxu0 0.0
    %982 = vmatpush1.xpose.msra.mxu0 0.0
    %983 = vmatprep.subr.mxu0 0.0
    %984 = vmatpush1.xpose.msra.mxu0 0.0
    %985 = vmatprep.subr.mxu0 0.0
    %986 = vmatpush1.xpose.msra.mxu0 0.0
    %987 = vmatprep.subr.mxu0 0.0
    %988 = vmatpush1.xpose.msra.mxu0 0.0
    %989 = vmatprep.subr.mxu0 0.0
    %990 = vmatpush1.xpose.msra.mxu0 0.0
    %991 = vmatprep.subr.mxu0 0.0
    %992 = vmatpush1.xpose.msra.mxu0 0.0
    %993 = vmatprep.subr.mxu0 0.0
    %994 = vmatpush1.xpose.msra.mxu0 0.0
    %995 = vmatprep.subr.mxu0 0.0
    %996 = vmatpush1.xpose.msra.mxu0 0.0
    %997 = vmatprep.subr.mxu0 0.0
    %998 = vmatpush1.xpose.msra.mxu0 0.0
    %999 = vmatprep.subr.mxu0 0.0
    %1000 = vmatpush1.xpose.msra.mxu0 0.0
    %1001 = vmatprep.subr.mxu0 0.0
    %1002 = vmatpush1.xpose.msra.mxu0 0.0
    %1003 = vmatprep.subr.mxu0 0.0
    %1004 = vmatpush1.xpose.msra.mxu0 0.0
    %1005 = vmatprep.subr.mxu0 0.0
    %1006 = vmatpush1.xpose.msra.mxu0 0.0
    %1007 = vmatprep.subr.mxu0 0.0
    %1008 = vmatpush1.xpose.msra.mxu0 0.0
    %1009 = vmatprep.subr.mxu0 0.0
    %1010 = vmatpush1.xpose.msra.mxu0 0.0
    %1011 = vmatprep.subr.mxu0 0.0
    %1012 = vmatpush1.xpose.msra.mxu0 0.0
    %1013 = vmatprep.subr.mxu0 0.0
    %1014 = vmatpush1.xpose.msra.mxu0 0.0
    %1015 = vmatprep.subr.mxu0 0.0
    %1016 = vmatpush1.xpose.msra.mxu0 0.0
    %1017 = vmatprep.subr.mxu0 0.0
    %1018 = vmatpush1.xpose.msra.mxu0 0.0
    %1019 = vmatprep.subr.mxu0 0.0
    %1020 = vmatpush1.xpose.msra.mxu0 0.0
    %1021 = vmatprep.subr.mxu0 0.0
    %1022 = vmatpush1.xpose.msra.mxu0 0.0
    %1023 = vmatprep.subr.mxu0 0.0
    %1024 = vmatpush1.xpose.msra.mxu0 0.0
    %1025 = vmatprep.subr.mxu0 0.0
    %1026 = vmatpush1.xpose.msra.mxu0 0.0
    %1027 = vmatprep.subr.mxu0 0.0
    %1028 = vmatpush1.xpose.msra.mxu0 0.0
    %1029 = vmatprep.subr.mxu0 0.0
    %1030 = vmatpush1.xpose.msra.mxu0 0.0
    %1031 = vmatprep.subr.mxu0 0.0
    %1032 = vmatpush1.xpose.msra.mxu0 0.0
    %1033 = vmatprep.mubr.f32.mxu0 0.0
    %1034 = vmatmul.mubr.f32.gmra.mrb[0].mxu0 %v961
    %v1035 = vpop.f32.mrb[0].mxu0
    %v1036 = vadd.f32 0.0, %v1035
    %v1037 = vpop.f32.mrb[0].mxu0
    %1038 = vmatprep.mubr.f32.mxu0 0.0
    %1039 = vmatmul.mubr.f32.gmra.mrb[0].mxu0 %v963
    %v1040 = vpop.f32.mrb[0].mxu0
    %v1041 = vadd.f32 0.0, %v1040
    %v1042 = vpop.f32.mrb[0].mxu0
    %1043 = vdwg.mxu0
    %v1044 = vmul.f32 %v1036, 0.17677669
    %v1045 = vmul.f32 %v1041, 0.17677669
    %v1046 = vadd.f32 %v1044, %v143
    %v1047 = vadd.f32 %v1045, %v144
    %v1048 = vsel %vm391, %v1046, -inf
    %1049 = vmax.xlane.f32.xlu0 %v1048
    %v1050 = vpop.xlane.xlu0 %1049
    %v1051 = vsel %vm391, %v1047, -inf
    %1052 = vmax.xlane.f32.xlu0 %v1051
    %v1053 = vpop.xlane.xlu0 %1052
    %v1054 = vsub.f32 %v1046, %v1050
    %v1055 = vsub.f32 %v1047, %v1053
    %v1056 = vmul.f32 %v1054, 1.442695
    %v1057 = vpow.pop %v1056
    %v1058 = vmul.f32 %v1055, 1.442695
    %v1059 = vpow.pop %v1058
    %v1060 = vsel %vm391, %v1057, 0.0
    %1061 = vadd.xlane.f32.xlu0 %v1060
    %v1062 = vpop.xlane.xlu0 %1061
    %v1063 = vsel %vm391, %v1059, 0.0
    %1064 = vadd.xlane.f32.xlu0 %v1063
    %v1065 = vpop.xlane.xlu0 %1064
    %v1066 = vrcp.pop %v1062
    %v1067 = vrcp.pop %v1065
    %v1068 = vmul.f32 %v1057, %v1066
    %v1069 = vmul.f32 %v1059, %v1067
    %s1070 = scalar_lea.vmem %s9, 16
    %1071 = vst.msk [vmem:[%s1070] sm:$0xff] %vm391, %v1068
    %1072 = vst.msk [vmem:[%s1070 + $0x8] sm:$0xff] %vm391, %v1069
    %1073 = vrot.lane.b32.xlu0 %v947, 64
    %v1074 = vpop.permute.xlu0 %1073
    %1075 = vrot.lane.b32.xlu0 %v952, 64
    %v1076 = vpop.permute.xlu0 %1075
    %v1080 = vsel %vm391, %v1068, 0
    %v1083 = vsel %vm391, %v1069, 0
    %1085 = vmatprep.subr.mxu0 0.0
    %1086 = vmatpush1.msra.mxu0 %v1074
    %1087 = vmatprep.subr.mxu0 0.0
    %1088 = vmatpush1.msra.mxu0 %v1076
    %1089 = vmatprep.subr.mxu0 0.0
    %1090 = vmatpush1.msra.mxu0 0.0
    %1091 = vmatprep.subr.mxu0 0.0
    %1092 = vmatpush1.msra.mxu0 0.0
    %1093 = vmatprep.subr.mxu0 0.0
    %1094 = vmatpush1.msra.mxu0 0.0
    %1095 = vmatprep.subr.mxu0 0.0
    %1096 = vmatpush1.msra.mxu0 0.0
    %1097 = vmatprep.subr.mxu0 0.0
    %1098 = vmatpush1.msra.mxu0 0.0
    %1099 = vmatprep.subr.mxu0 0.0
    %1100 = vmatpush1.msra.mxu0 0.0
    %1101 = vmatprep.subr.mxu0 0.0
    %1102 = vmatpush1.msra.mxu0 0.0
    %1103 = vmatprep.subr.mxu0 0.0
    %1104 = vmatpush1.msra.mxu0 0.0
    %1105 = vmatprep.subr.mxu0 0.0
    %1106 = vmatpush1.msra.mxu0 0.0
    %1107 = vmatprep.subr.mxu0 0.0
    %1108 = vmatpush1.msra.mxu0 0.0
    %1109 = vmatprep.subr.mxu0 0.0
    %1110 = vmatpush1.msra.mxu0 0.0
    %1111 = vmatprep.subr.mxu0 0.0
    %1112 = vmatpush1.msra.mxu0 0.0
    %1113 = vmatprep.subr.mxu0 0.0
    %1114 = vmatpush1.msra.mxu0 0.0
    %1115 = vmatprep.subr.mxu0 0.0
    %1116 = vmatpush1.msra.mxu0 0.0
    %1117 = vmatprep.subr.mxu0 0.0
    %1118 = vmatpush1.msra.mxu0 0.0
    %1119 = vmatprep.subr.mxu0 0.0
    %1120 = vmatpush1.msra.mxu0 0.0
    %1121 = vmatprep.subr.mxu0 0.0
    %1122 = vmatpush1.msra.mxu0 0.0
    %1123 = vmatprep.subr.mxu0 0.0
    %1124 = vmatpush1.msra.mxu0 0.0
    %1125 = vmatprep.subr.mxu0 0.0
    %1126 = vmatpush1.msra.mxu0 0.0
    %1127 = vmatprep.subr.mxu0 0.0
    %1128 = vmatpush1.msra.mxu0 0.0
    %1129 = vmatprep.subr.mxu0 0.0
    %1130 = vmatpush1.msra.mxu0 0.0
    %1131 = vmatprep.subr.mxu0 0.0
    %1132 = vmatpush1.msra.mxu0 0.0
    %1133 = vmatprep.subr.mxu0 0.0
    %1134 = vmatpush1.msra.mxu0 0.0
    %1135 = vmatprep.subr.mxu0 0.0
    %1136 = vmatpush1.msra.mxu0 0.0
    %1137 = vmatprep.subr.mxu0 0.0
    %1138 = vmatpush1.msra.mxu0 0.0
    %1139 = vmatprep.subr.mxu0 0.0
    %1140 = vmatpush1.msra.mxu0 0.0
    %1141 = vmatprep.subr.mxu0 0.0
    %1142 = vmatpush1.msra.mxu0 0.0
    %1143 = vmatprep.subr.mxu0 0.0
    %1144 = vmatpush1.msra.mxu0 0.0
    %1145 = vmatprep.subr.mxu0 0.0
    %1146 = vmatpush1.msra.mxu0 0.0
    %1147 = vmatprep.subr.mxu0 0.0
    %1148 = vmatpush1.msra.mxu0 0.0
    %1149 = vmatprep.mubr.f32.mxu0 0.0
    %1150 = vmatmul.mubr.f32.gmra.mrb[0].mxu0 %v1080
    %v1151 = vpop.f32.mrb[0].mxu0
    %v1152 = vadd.f32 0.0, %v1151
    %v1153 = vpop.f32.mrb[0].mxu0
    %1154 = vmatprep.mubr.f32.mxu0 0.0
    %1155 = vmatmul.mubr.f32.gmra.mrb[0].mxu0 %v1083
    %v1156 = vpop.f32.mrb[0].mxu0
    %v1157 = vadd.f32 0.0, %v1156
    %v1158 = vpop.f32.mrb[0].mxu0
    %1159 = vdwg.mxu0
    %v1160 = vlaneseq
    %v1161 = vshrl.u32 %v1160, 7
    %v1162 = vsub.s32 0, %v1161
    %v1163 = vrot.slane %v827, %v1162
    %v1165 = vsel %vm173, %v1152, 0
    %v1168 = vsel %vm173, %v1157, 0
    %1170 = vmatprep.subr.mxu0 0.0
    %1171 = vmatpush1.msra.mxu0 %v807
    %1172 = vmatprep.subr.mxu0 0.0
    %1173 = vmatpush1.msra.mxu0 %v808
    %1174 = vmatprep.subr.mxu0 0.0
    %1175 = vmatpush1.msra.mxu0 %v809
    %1176 = vmatprep.subr.mxu0 0.0
    %1177 = vmatpush1.msra.mxu0 %v810
    %1178 = vmatprep.subr.mxu0 0.0
    %1179 = vmatpush1.msra.mxu0 0.0
    %1180 = vmatprep.subr.mxu0 0.0
    %1181 = vmatpush1.msra.mxu0 0.0
    %1182 = vmatprep.subr.mxu0 0.0
    %1183 = vmatpush1.msra.mxu0 0.0
    %1184 = vmatprep.subr.mxu0 0.0
    %1185 = vmatpush1.msra.mxu0 0.0
    %1186 = vmatprep.subr.mxu0 0.0
    %1187 = vmatpush1.msra.mxu0 0.0
    %1188 = vmatprep.subr.mxu0 0.0
    %1189 = vmatpush1.msra.mxu0 0.0
    %1190 = vmatprep.subr.mxu0 0.0
    %1191 = vmatpush1.msra.mxu0 0.0
    %1192 = vmatprep.subr.mxu0 0.0
    %1193 = vmatpush1.msra.mxu0 0.0
    %1194 = vmatprep.subr.mxu0 0.0
    %1195 = vmatpush1.msra.mxu0 0.0
    %1196 = vmatprep.subr.mxu0 0.0
    %1197 = vmatpush1.msra.mxu0 0.0
    %1198 = vmatprep.subr.mxu0 0.0
    %1199 = vmatpush1.msra.mxu0 0.0
    %1200 = vmatprep.subr.mxu0 0.0
    %1201 = vmatpush1.msra.mxu0 0.0
    %1202 = vmatprep.subr.mxu0 0.0
    %1203 = vmatpush1.msra.mxu0 0.0
    %1204 = vmatprep.subr.mxu0 0.0
    %1205 = vmatpush1.msra.mxu0 0.0
    %1206 = vmatprep.subr.mxu0 0.0
    %1207 = vmatpush1.msra.mxu0 0.0
    %1208 = vmatprep.subr.mxu0 0.0
    %1209 = vmatpush1.msra.mxu0 0.0
    %1210 = vmatprep.subr.mxu0 0.0
    %1211 = vmatpush1.msra.mxu0 0.0
    %1212 = vmatprep.subr.mxu0 0.0
    %1213 = vmatpush1.msra.mxu0 0.0
    %1214 = vmatprep.subr.mxu0 0.0
    %1215 = vmatpush1.msra.mxu0 0.0
    %1216 = vmatprep.subr.mxu0 0.0
    %1217 = vmatpush1.msra.mxu0 0.0
    %1218 = vmatprep.subr.mxu0 0.0
    %1219 = vmatpush1.msra.mxu0 0.0
    %1220 = vmatprep.subr.mxu0 0.0
    %1221 = vmatpush1.msra.mxu0 0.0
    %1222 = vmatprep.subr.mxu0 0.0
    %1223 = vmatpush1.msra.mxu0 0.0
    %1224 = vmatprep.subr.mxu0 0.0
    %1225 = vmatpush1.msra.mxu0 0.0
    %1226 = vmatprep.subr.mxu0 0.0
    %1227 = vmatpush1.msra.mxu0 0.0
    %1228 = vmatprep.subr.mxu0 0.0
    %1229 = vmatpush1.msra.mxu0 0.0
    %1230 = vmatprep.subr.mxu0 0.0
    %1231 = vmatpush1.msra.mxu0 0.0
    %1232 = vmatprep.subr.mxu0 0.0
    %1233 = vmatpush1.msra.mxu0 0.0
    %1234 = vmatprep.mubr.f32.mxu0 0.0
    %1235 = vmatmul.mubr.f32.gmra.mrb[0].mxu0 %v1165
    %v1236 = vpop.f32.mrb[0].mxu0
    %v1237 = vadd.f32 %v1163, %v1236
    %v1238 = vpop.f32.mrb[0].mxu0
    %1239 = vmatprep.mubr.f32.mxu0 0.0
    %1240 = vmatmul.mubr.f32.gmra.mrb[0].mxu0 %v1168
    %v1241 = vpop.f32.mrb[0].mxu0
    %v1242 = vadd.f32 %v1163, %v1241
    %v1243 = vpop.f32.mrb[0].mxu0
    %1244 = vdwg.mxu0
    %v1245 = vadd.f32 %v800, %v1237
    %v1246 = vadd.f32 %v801, %v1242
    %v1247 = vsel %vm173, %v1245, 0.0
    %1248 = vadd.xlane.f32.xlu0 %v1247
    %v1249 = vpop.xlane.xlu0 %1248
    %v1250 = vsel %vm173, %v1246, 0.0
    %1251 = vadd.xlane.f32.xlu0 %v1250
    %v1252 = vpop.xlane.xlu0 %1251
    %v1253 = vmul.f32 %v1249, %v180
    %v1254 = vmul.f32 %v1252, %v180
    %v1255 = vsub.f32 %v1245, %v1253
    %v1256 = vsub.f32 %v1246, %v1254
    %v1257 = vmul.f32 %v1255, %v1255
    %v1258 = vmul.f32 %v1256, %v1256
    %v1259 = vsel %vm173, %v1257, 0.0
    %1260 = vadd.xlane.f32.xlu0 %v1259
    %v1261 = vpop.xlane.xlu0 %1260
    %v1262 = vsel %vm173, %v1258, 0.0
    %1263 = vadd.xlane.f32.xlu0 %v1262
    %v1264 = vpop.xlane.xlu0 %1263
    %v1265 = vmul.f32 %v1261, %v180
    %v1266 = vmul.f32 %v1264, %v180
    %v1267 = vadd.f32 %v1265, 1e-05
    %v1268 = vadd.f32 %v1266, 1e-05
    %v1269 = vrsqrt.pop %v1267
    %v1270 = vrsqrt.pop %v1268
    %v1271 = vmul.f32 %v1255, %v1269
    %v1272 = vmul.f32 %v1256, %v1270
    %v1273 = vlaneseq
    %v1274 = vshrl.u32 %v1273, 7
    %v1275 = vsub.s32 0, %v1274
    %v1276 = vrot.slane %v828, %v1275
    %v1277 = vmul.f32 %v1271, %v1276
    %v1278 = vmul.f32 %v1272, %v1276
    %v1279 = vlaneseq
    %v1280 = vshrl.u32 %v1279, 7
    %v1281 = vsub.s32 0, %v1280
    %v1282 = vrot.slane %v829, %v1281
    %v1283 = vadd.f32 %v1277, %v1282
    %v1284 = vadd.f32 %v1278, %v1282
    %v1285 = vlaneseq
    %v1286 = vshrl.u32 %v1285, 7
    %v1287 = vsub.s32 0, %v1286
    %v1288 = vrot.slane %v830, %v1287
    %v1290 = vsel %vm173, %v1283, 0
    %v1293 = vsel %vm173, %v1284, 0
    %1295 = vmatprep.subr.mxu0 0.0
    %1296 = vmatpush1.msra.mxu0 %v811
    %1297 = vmatprep.subr.mxu0 0.0
    %1298 = vmatpush1.msra.mxu0 %v812
    %1299 = vmatprep.subr.mxu0 0.0
    %1300 = vmatpush1.msra.mxu0 %v813
    %1301 = vmatprep.subr.mxu0 0.0
    %1302 = vmatpush1.msra.mxu0 %v814
    %1303 = vmatprep.subr.mxu0 0.0
    %1304 = vmatpush1.msra.mxu0 0.0
    %1305 = vmatprep.subr.mxu0 0.0
    %1306 = vmatpush1.msra.mxu0 0.0
    %1307 = vmatprep.subr.mxu0 0.0
    %1308 = vmatpush1.msra.mxu0 0.0
    %1309 = vmatprep.subr.mxu0 0.0
    %1310 = vmatpush1.msra.mxu0 0.0
    %1311 = vmatprep.subr.mxu0 0.0
    %1312 = vmatpush1.msra.mxu0 0.0
    %1313 = vmatprep.subr.mxu0 0.0
    %1314 = vmatpush1.msra.mxu0 0.0
    %1315 = vmatprep.subr.mxu0 0.0
    %1316 = vmatpush1.msra.mxu0 0.0
    %1317 = vmatprep.subr.mxu0 0.0
    %1318 = vmatpush1.msra.mxu0 0.0
    %1319 = vmatprep.subr.mxu0 0.0
    %1320 = vmatpush1.msra.mxu0 0.0
    %1321 = vmatprep.subr.mxu0 0.0
    %1322 = vmatpush1.msra.mxu0 0.0
    %1323 = vmatprep.subr.mxu0 0.0
    %1324 = vmatpush1.msra.mxu0 0.0
    %1325 = vmatprep.subr.mxu0 0.0
    %1326 = vmatpush1.msra.mxu0 0.0
    %1327 = vmatprep.subr.mxu0 0.0
    %1328 = vmatpush1.msra.mxu0 0.0
    %1329 = vmatprep.subr.mxu0 0.0
    %1330 = vmatpush1.msra.mxu0 0.0
    %1331 = vmatprep.subr.mxu0 0.0
    %1332 = vmatpush1.msra.mxu0 0.0
    %1333 = vmatprep.subr.mxu0 0.0
    %1334 = vmatpush1.msra.mxu0 0.0
    %1335 = vmatprep.subr.mxu0 0.0
    %1336 = vmatpush1.msra.mxu0 0.0
    %1337 = vmatprep.subr.mxu0 0.0
    %1338 = vmatpush1.msra.mxu0 0.0
    %1339 = vmatprep.subr.mxu0 0.0
    %1340 = vmatpush1.msra.mxu0 0.0
    %1341 = vmatprep.subr.mxu0 0.0
    %1342 = vmatpush1.msra.mxu0 0.0
    %1343 = vmatprep.subr.mxu0 0.0
    %1344 = vmatpush1.msra.mxu0 0.0
    %1345 = vmatprep.subr.mxu0 0.0
    %1346 = vmatpush1.msra.mxu0 0.0
    %1347 = vmatprep.subr.mxu0 0.0
    %1348 = vmatpush1.msra.mxu0 0.0
    %1349 = vmatprep.subr.mxu0 0.0
    %1350 = vmatpush1.msra.mxu0 0.0
    %1351 = vmatprep.subr.mxu0 0.0
    %1352 = vmatpush1.msra.mxu0 0.0
    %1353 = vmatprep.subr.mxu0 0.0
    %1354 = vmatpush1.msra.mxu0 0.0
    %1355 = vmatprep.subr.mxu0 0.0
    %1356 = vmatpush1.msra.mxu0 0.0
    %1357 = vmatprep.subr.mxu0 0.0
    %1358 = vmatpush1.msra.mxu0 0.0
    %1359 = vmatprep.mubr.f32.mxu0 0.0
    %1360 = vmatmul.mubr.f32.gmra.mrb[0].mxu0 %v1290
    %v1361 = vpop.f32.mrb[0].mxu0
    %v1362 = vadd.f32 %v1288, %v1361
    %v1363 = vpop.f32.mrb[0].mxu0
    %1364 = vmatprep.mubr.f32.mxu0 0.0
    %1365 = vmatmul.mubr.f32.gmra.mrb[0].mxu0 %v1293
    %v1366 = vpop.f32.mrb[0].mxu0
    %v1367 = vadd.f32 %v1288, %v1366
    %v1368 = vpop.f32.mrb[0].mxu0
    %1369 = vdwg.mxu0
    %v1370 = vmax.f32 %v1362, 0.0
    %v1371 = vmax.f32 %v1367, 0.0
    %v1372 = vlaneseq
    %v1373 = vshrl.u32 %v1372, 7
    %v1374 = vsub.s32 0, %v1373
    %v1375 = vrot.slane %v831, %v1374
    %v1377 = vsel %vm55, %v1370, 0
    %v1380 = vsel %vm55, %v1371, 0
    %1382 = vmatprep.subr.mxu0 0.0
    %1383 = vmatpush1.msra.mxu0 %v815
    %1384 = vmatprep.subr.mxu0 0.0
    %1385 = vmatpush1.msra.mxu0 %v816
    %1386 = vmatprep.subr.mxu0 0.0
    %1387 = vmatpush1.msra.mxu0 %v817
    %1388 = vmatprep.subr.mxu0 0.0
    %1389 = vmatpush1.msra.mxu0 %v818
    %1390 = vmatprep.subr.mxu0 0.0
    %1391 = vmatpush1.msra.mxu0 %v819
    %1392 = vmatprep.subr.mxu0 0.0
    %1393 = vmatpush1.msra.mxu0 %v820
    %1394 = vmatprep.subr.mxu0 0.0
    %1395 = vmatpush1.msra.mxu0 %v821
    %1396 = vmatprep.subr.mxu0 0.0
    %1397 = vmatpush1.msra.mxu0 %v822
    %1398 = vmatprep.subr.mxu0 0.0
    %1399 = vmatpush1.msra.mxu0 0.0
    %1400 = vmatprep.subr.mxu0 0.0
    %1401 = vmatpush1.msra.mxu0 0.0
    %1402 = vmatprep.subr.mxu0 0.0
    %1403 = vmatpush1.msra.mxu0 0.0
    %1404 = vmatprep.subr.mxu0 0.0
    %1405 = vmatpush1.msra.mxu0 0.0
    %1406 = vmatprep.subr.mxu0 0.0
    %1407 = vmatpush1.msra.mxu0 0.0
    %1408 = vmatprep.subr.mxu0 0.0
    %1409 = vmatpush1.msra.mxu0 0.0
    %1410 = vmatprep.subr.mxu0 0.0
    %1411 = vmatpush1.msra.mxu0 0.0
    %1412 = vmatprep.subr.mxu0 0.0
    %1413 = vmatpush1.msra.mxu0 0.0
    %1414 = vmatprep.subr.mxu0 0.0
    %1415 = vmatpush1.msra.mxu0 0.0
    %1416 = vmatprep.subr.mxu0 0.0
    %1417 = vmatpush1.msra.mxu0 0.0
    %1418 = vmatprep.subr.mxu0 0.0
    %1419 = vmatpush1.msra.mxu0 0.0
    %1420 = vmatprep.subr.mxu0 0.0
    %1421 = vmatpush1.msra.mxu0 0.0
    %1422 = vmatprep.subr.mxu0 0.0
    %1423 = vmatpush1.msra.mxu0 0.0
    %1424 = vmatprep.subr.mxu0 0.0
    %1425 = vmatpush1.msra.mxu0 0.0
    %1426 = vmatprep.subr.mxu0 0.0
    %1427 = vmatpush1.msra.mxu0 0.0
    %1428 = vmatprep.subr.mxu0 0.0
    %1429 = vmatpush1.msra.mxu0 0.0
    %1430 = vmatprep.subr.mxu0 0.0
    %1431 = vmatpush1.msra.mxu0 0.0
    %1432 = vmatprep.subr.mxu0 0.0
    %1433 = vmatpush1.msra.mxu0 0.0
    %1434 = vmatprep.subr.mxu0 0.0
    %1435 = vmatpush1.msra.mxu0 0.0
    %1436 = vmatprep.subr.mxu0 0.0
    %1437 = vmatpush1.msra.mxu0 0.0
    %1438 = vmatprep.subr.mxu0 0.0
    %1439 = vmatpush1.msra.mxu0 0.0
    %1440 = vmatprep.subr.mxu0 0.0
    %1441 = vmatpush1.msra.mxu0 0.0
    %1442 = vmatprep.subr.mxu0 0.0
    %1443 = vmatpush1.msra.mxu0 0.0
    %1444 = vmatprep.subr.mxu0 0.0
    %1445 = vmatpush1.msra.mxu0 0.0
    %1446 = vmatprep.mubr.f32.mxu0 0.0
    %1447 = vmatmul.mubr.f32.gmra.mrb[0].mxu0 %v1377
    %v1448 = vpop.f32.mrb[0].mxu0
    %v1449 = vadd.f32 %v1375, %v1448
    %v1450 = vpop.f32.mrb[0].mxu0
    %1451 = vmatprep.mubr.f32.mxu0 0.0
    %1452 = vmatmul.mubr.f32.gmra.mrb[0].mxu0 %v1380
    %v1453 = vpop.f32.mrb[0].mxu0
    %v1454 = vadd.f32 %v1375, %v1453
    %v1455 = vpop.f32.mrb[0].mxu0
    %1456 = vdwg.mxu0
    %v1457 = vadd.f32 %v1245, %v1449
    %v1458 = vadd.f32 %v1246, %v1454
    %v1459 = vld [vmem:[%s6] sm:$0xff]
    %v1460 = vld [vmem:[%s6 + $0x8] sm:$0xff]
    %v1461 = vld [vmem:[%s6 + $0x10] sm:$0xff]
    %v1462 = vld [vmem:[%s6 + $0x18] sm:$0xff]
    %v1463 = vld [vmem:[%s7] sm:$0x1]
    %v1465 = vlaneseq
    %v1466 = vshrl.u32 %v1465, 7
    %v1467 = vsub.s32 0, %v1466
    %v1468 = vrot.slane %v1463, %v1467
    %v1471 = vsel %vm173, %v1457, 0
    %v1474 = vsel %vm173, %v1458, 0
    %1476 = vmatprep.subr.mxu0 0.0
    %1477 = vmatpush1.msra.mxu0 %v1459
    %1478 = vmatprep.subr.mxu0 0.0
    %1479 = vmatpush1.msra.mxu0 %v1460
    %1480 = vmatprep.subr.mxu0 0.0
    %1481 = vmatpush1.msra.mxu0 %v1461
    %1482 = vmatprep.subr.mxu0 0.0
    %1483 = vmatpush1.msra.mxu0 %v1462
    %1484 = vmatprep.subr.mxu0 0.0
    %1485 = vmatpush1.msra.mxu0 0.0
    %1486 = vmatprep.subr.mxu0 0.0
    %1487 = vmatpush1.msra.mxu0 0.0
    %1488 = vmatprep.subr.mxu0 0.0
    %1489 = vmatpush1.msra.mxu0 0.0
    %1490 = vmatprep.subr.mxu0 0.0
    %1491 = vmatpush1.msra.mxu0 0.0
    %1492 = vmatprep.subr.mxu0 0.0
    %1493 = vmatpush1.msra.mxu0 0.0
    %1494 = vmatprep.subr.mxu0 0.0
    %1495 = vmatpush1.msra.mxu0 0.0
    %1496 = vmatprep.subr.mxu0 0.0
    %1497 = vmatpush1.msra.mxu0 0.0
    %1498 = vmatprep.subr.mxu0 0.0
    %1499 = vmatpush1.msra.mxu0 0.0
    %1500 = vmatprep.subr.mxu0 0.0
    %1501 = vmatpush1.msra.mxu0 0.0
    %1502 = vmatprep.subr.mxu0 0.0
    %1503 = vmatpush1.msra.mxu0 0.0
    %1504 = vmatprep.subr.mxu0 0.0
    %1505 = vmatpush1.msra.mxu0 0.0
    %1506 = vmatprep.subr.mxu0 0.0
    %1507 = vmatpush1.msra.mxu0 0.0
    %1508 = vmatprep.subr.mxu0 0.0
    %1509 = vmatpush1.msra.mxu0 0.0
    %1510 = vmatprep.subr.mxu0 0.0
    %1511 = vmatpush1.msra.mxu0 0.0
    %1512 = vmatprep.subr.mxu0 0.0
    %1513 = vmatpush1.msra.mxu0 0.0
    %1514 = vmatprep.subr.mxu0 0.0
    %1515 = vmatpush1.msra.mxu0 0.0
    %1516 = vmatprep.subr.mxu0 0.0
    %1517 = vmatpush1.msra.mxu0 0.0
    %1518 = vmatprep.subr.mxu0 0.0
    %1519 = vmatpush1.msra.mxu0 0.0
    %1520 = vmatprep.subr.mxu0 0.0
    %1521 = vmatpush1.msra.mxu0 0.0
    %1522 = vmatprep.subr.mxu0 0.0
    %1523 = vmatpush1.msra.mxu0 0.0
    %1524 = vmatprep.subr.mxu0 0.0
    %1525 = vmatpush1.msra.mxu0 0.0
    %1526 = vmatprep.subr.mxu0 0.0
    %1527 = vmatpush1.msra.mxu0 0.0
    %1528 = vmatprep.subr.mxu0 0.0
    %1529 = vmatpush1.msra.mxu0 0.0
    %1530 = vmatprep.subr.mxu0 0.0
    %1531 = vmatpush1.msra.mxu0 0.0
    %1532 = vmatprep.subr.mxu0 0.0
    %1533 = vmatpush1.msra.mxu0 0.0
    %1534 = vmatprep.subr.mxu0 0.0
    %1535 = vmatpush1.msra.mxu0 0.0
    %1536 = vmatprep.subr.mxu0 0.0
    %1537 = vmatpush1.msra.mxu0 0.0
    %1538 = vmatprep.subr.mxu0 0.0
    %1539 = vmatpush1.msra.mxu0 0.0
    %1540 = vmatprep.mubr.f32.mxu0 0.0
    %1541 = vmatmul.mubr.f32.gmra.mrb[0].mxu0 %v1471
    %v1542 = vpop.f32.mrb[0].mxu0
    %v1543 = vadd.f32 %v1468, %v1542
    %v1544 = vpop.f32.mrb[0].mxu0
    %1545 = vmatprep.mubr.f32.mxu0 0.0
    %1546 = vmatmul.mubr.f32.gmra.mrb[0].mxu0 %v1474
    %v1547 = vpop.f32.mrb[0].mxu0
    %v1548 = vadd.f32 %v1468, %v1547
    %v1549 = vpop.f32.mrb[0].mxu0
    %1550 = vdwg.mxu0
    %1551 = vst.msk [vmem:[%s8] sm:$0xff] %vm173, %v1543
    %1552 = vst.msk [vmem:[%s8 + $0x8] sm:$0xff] %vm173, %v1548
    // Predicated region
    $region38: #{transformer_forward.1} parent=1 // pred_check
      _
    $region39: #{transformer_forward.1} parent=1 // pred_check_branch
      %1554 = sbr.rel (0) target = $region41
    $region40: #{transformer_forward.1} parent=1 // pred_region
      _
    $region41: #{transformer_forward.1} parent=1 // pred_fallthru
      _
    // Predicated region
    $region42: #{transformer_forward.1} parent=1 // pred_check
      _
    $region43: #{transformer_forward.1} parent=1 // pred_check_branch
      %1556 = sbr.rel (0) target = $region45
    $region44: #{transformer_forward.1} parent=1 // pred_region
      _
    $region45: #{transformer_forward.1} parent=1 // pred_fallthru
      _
    // Predicated region
    $region46: #{transformer_forward.1} parent=1 // pred_check
      _
    $region47: #{transformer_forward.1} parent=1 // pred_check_branch
      %1558 = sbr.rel (0) target = $region49
    $region48: #{transformer_forward.1} parent=1 // pred_region
      _
    $region49: #{transformer_forward.1} parent=1 // pred_fallthru
      _
    // Predicated region
    $region50: #{transformer_forward.1} parent=1 // pred_check
      _
    $region51: #{transformer_forward.1} parent=1 // pred_check_branch
      %1560 = sbr.rel (0) target = $region53
    $region52: #{transformer_forward.1} parent=1 // pred_region
      _
    $region53: #{transformer_forward.1} parent=1 // pred_fallthru
      _
    %1561 = vsyncpa [#allocation3], 1

</llo_original>
